<compile_context>
chip_gen: v7x
topology: tpu7x:2x2x1
jax: 0.10.0
libtpu: 0.0.40
codegen_flags: <defaults>
</compile_context>

<pallas_src>
import functools

import jax
import jax.numpy as jnp
from jax.experimental import pallas as pl
from jax.experimental.pallas import tpu as pltpu

F32 = jnp.float32


# ----------------------------------------------------------------------------
# Fused embedding kernel: one grid step = bb batch elements -> (bb*T*J, d) rows.
# ----------------------------------------------------------------------------
def _act_embed_kernel(m_idx_ref, a_ref, bits_ref, wtab_ref, pos_ref, o_ref,
                      *, bb, T, J, n_morph, k_pad):
    """
    m_idx_ref : SMEM (B_pad,) int32          (scalar prefetch)
    a_ref     : VMEM (bb, TJ) f32            action scalar per token
    bits_ref  : VMEM (bb, TJ) int32          bit0 slide, bit1 hinge, bit2 global(&has_global),
                                             bit3 act_mask, bits>=4 morphology id
    wtab_ref  : VMEM (k_pad, d) f32          [Ws; bs; Wh; bh; w_act; Wg_all; 0-pad]  (resident)
    pos_ref   : VMEM (n_morph, J, d) f32     per-morphology position embedding       (resident)
    o_ref     : VMEM (bb*TJ, d) out dtype
    """
    i = pl.program_id(0)
    TJ = T * J

    a = a_ref[...]                                       # (bb, TJ) f32
    bits = bits_ref[...]                                 # (bb, TJ) int32

    s = (bits & 1).astype(F32)
    h = ((bits >> 1) & 1).astype(F32)
    g = ((bits >> 2) & 1).astype(F32)                    # already gated by has_global[m_idx]
    am = ((bits >> 3) & 1).astype(F32)
    m_tok = bits >> 4                                    # morphology id per token

    # JointEmbedding where-chain priority: global > hinge > slide.
    h_eff = h * (1.0 - g)
    s_eff = s * (1.0 - h) * (1.0 - g)
    ag = a * g

    # Batch-independent contraction on the MXU, batch folded into M = bb*TJ.
    cols = [a * s_eff, s_eff, a * h_eff, h_eff, am]
    for m in range(n_morph):                             # onehot(m_idx) columns -> Wg_all rows
        cols.append(ag * (m_tok == m).astype(F32))
    for _ in range(k_pad - len(cols)):                   # zero-pad K to the table's row count
        cols.append(jnp.zeros_like(a))
    coef = jnp.stack(cols, axis=-1).reshape(bb * TJ, k_pad)
    acc = jnp.dot(coef, wtab_ref[...], preferred_element_type=jnp.float32)   # (bb*TJ, d) f32

    # Per-batch morphology position embedding: VPU adds while the MXU result drains.
    for b in range(bb):                                  # static unroll; bb is small
        m = m_idx_ref[i * bb + b]                        # scalar read from SMEM
        pos = jnp.tile(pos_ref[m], (T, 1))               # (TJ, d)
        lo = b * TJ
        o_ref[lo:lo + TJ, :] = (acc[lo:lo + TJ, :] + pos).astype(o_ref.dtype)


def _pick_block(B, TJ, d, out_itemsize):
    """Batch elements per grid step (multiple of 8 unless a single full-array step)."""
    # Keep one pipelined output block <= ~4 MiB so the double-buffered working set stays far
    # below scoped-VMEM defaults on every generation (16/32/32 MiB on v5e/v6e/v7x).
    rows_cap = max(8, (4 << 20) // (d * max(out_itemsize, 4)))
    bb_cap = max(8, (rows_cap // max(TJ, 1)) // 8 * 8)
    if B <= 8:
        bb = B                                           # single step; block == full array
    else:
        half = max(8, ((B // 2) // 8) * 8)               # ~B/2 -> >=2 "parallel" steps (v7x)
        bb = min(bb_cap, half)
    B_pad = -(-B // bb) * bb
    return bb, B_pad


def _act_embed_call(m_idx, a, bits, wtab, pos_all, *, T, J, bb, out_dtype):
    B_pad, TJ = a.shape
    k_pad, d = wtab.shape
    n_morph = pos_all.shape[0]
    grid = B_pad // bb
    rows = bb * TJ

    kernel = functools.partial(_act_embed_kernel, bb=bb, T=T, J=J,
                               n_morph=n_morph, k_pad=k_pad)

    out_bytes = B_pad * TJ * d * jnp.dtype(out_dtype).itemsize
    cost = pl.CostEstimate(
        flops=2 * B_pad * TJ * k_pad * d + B_pad * TJ * d,
        transcendentals=0,
        bytes_accessed=(a.size * 4 + bits.size * 4 + wtab.size * 4
                        + pos_all.size * 4 + out_bytes))

    return pl.pallas_call(
        kernel,
        grid_spec=pltpu.PrefetchScalarGridSpec(
            num_scalar_prefetch=1,
            grid=(grid,),
            in_specs=[
                pl.BlockSpec((bb, TJ), lambda i, m_idx_ref: (i, 0)),              # a
                pl.BlockSpec((bb, TJ), lambda i, m_idx_ref: (i, 0)),              # bits
                pl.BlockSpec((k_pad, d), lambda i, m_idx_ref: (0, 0)),            # weight table
                pl.BlockSpec((n_morph, J, d), lambda i, m_idx_ref: (0, 0, 0)),    # pos table
            ],
            out_specs=pl.BlockSpec((rows, d), lambda i, m_idx_ref: (i, 0)),
        ),
        out_shape=jax.ShapeDtypeStruct((B_pad * TJ, d), out_dtype),
        compiler_params=pltpu.CompilerParams(dimension_semantics=("parallel",)),
        cost_estimate=cost,
    )(m_idx, a, bits, wtab, pos_all)


# ----------------------------------------------------------------------------
# ActMorphologyTransformer.forward
# ----------------------------------------------------------------------------
def act_morphology_transformer(params, data, encode_target=False, out_dtype=jnp.bfloat16):
    act = (data["act_target"] if encode_target else data["act"]).astype(F32)   # (B, T, J, d_a)
    B, T, J, _ = act.shape
    d = params["Ws"].shape[-1]
    TJ = T * J
    n_morph = params["Wg_all"].shape[0]
    m_idx = data["m_idx"].astype(jnp.int32)

    # Per-token inputs (one tiny elementwise XLA fusion; ~8 bytes/token of HBM traffic).
    a = act[..., 0].reshape(B, TJ)
    has_g = params["has_global"][m_idx] > 0                                    # (B,)
    bits = (data["slide_mask"].astype(jnp.int32)
            | (data["hinge_mask"].astype(jnp.int32) << 1)
            | ((data["global_mask"] & has_g[:, None, None]).astype(jnp.int32) << 2)
            | (data["act_mask"].astype(jnp.int32) << 3)
            | (m_idx[:, None, None] << 4)).reshape(B, TJ)

    # Small batch-independent weight table: [Ws; bs; Wh; bh; w_act; Wg_all; 0-pad].
    K = 5 + n_morph
    k_pad = ((K + 7) // 8) * 8
    wtab = jnp.concatenate(
        [params["Ws"], params["bs"], params["Wh"], params["bh"], params["w_act"],
         params["Wg_all"], jnp.zeros((k_pad - K, d), F32)], axis=0)            # (k_pad, d)

    bb, B_pad = _pick_block(B, TJ, d, jnp.dtype(out_dtype).itemsize)
    if B_pad != B:
        a = jnp.pad(a, ((0, B_pad - B), (0, 0)))
        bits = jnp.pad(bits, ((0, B_pad - B), (0, 0)))
        m_idx = jnp.pad(m_idx, (0, B_pad - B))

    y = _act_embed_call(m_idx, a, bits, wtab, params["pos_all"],
                        T=T, J=J, bb=bb, out_dtype=out_dtype)                  # (B_pad*TJ, d)
    y = y[:B * TJ].reshape(B, T, J, d)

    # TODO(synk): act_morphology_encoder (Transformer class not defined in the reference source)
    # treated as identity, so morph_mask / per-(B*T) t_idx attention masking is not applied.
    return y


# ----------------------------------------------------------------------------
# Pure-JAX reference of the defined portion of the module (for correctness check)
# ----------------------------------------------------------------------------
def reference_forward(params, data, encode_target=False):
    act = (data["act_target"] if encode_target else data["act"]).astype(F32)
    B, T, J, _ = act.shape
    d = params["Ws"].shape[-1]
    a1 = act[..., :1]
    emb = jnp.zeros((B, T, J, d), F32)
    emb = jnp.where(data["slide_mask"][..., None], a1 * params["Ws"][0] + params["bs"][0], emb)
    emb = jnp.where(data["hinge_mask"][..., None], a1 * params["Wh"][0] + params["bh"][0], emb)
    Wg_b = params["Wg_all"][data["m_idx"]]
    gmask = data["global_mask"] & (params["has_global"][data["m_idx"]] > 0)[:, None, None]
    emb = jnp.where(gmask[..., None], a1 * Wg_b[:, None, None, :], emb)
    emb = emb + data["act_mask"][..., None].astype(F32) * params["w_act"][0]
    emb = emb + params["pos_all"][data["m_idx"]][:, None, :, :]
    return emb


# ----------------------------------------------------------------------------
# deterministic parameter / data construction
# ----------------------------------------------------------------------------
def init_params(key, d, num_joint_list, num_global_list, J):
    ks = jax.random.split(key, 8)
    nrm = lambda k, shape, s=0.05: s * jax.random.normal(k, shape, F32)
    p = {}
    # act_embedding = JointEmbedding(slide_dim=1, hinge_dim=1, global_bias=False); (in,out) layout.
    p["Ws"] = nrm(ks[0], (1, d))
    p["bs"] = nrm(ks[1], (1, d))
    p["Wh"] = nrm(ks[2], (1, d))
    p["bh"] = nrm(ks[3], (1, d))
    p["w_act"] = nrm(ks[4], (1, d))                      # actuator_embedding Linear(1,d,bias=False)
    kg = jax.random.split(ks[5], len(num_global_list))
    Wg, hg = [], []
    for i, ng in enumerate(num_global_list):
        if ng > 0:
            Wg.append(nrm(kg[i], (d,))); hg.append(1.0)
        else:
            Wg.append(jnp.zeros((d,), F32)); hg.append(0.0)
    p["Wg_all"] = jnp.stack(Wg)                          # (n_morph, d)
    p["has_global"] = jnp.array(hg, F32)
    kp = jax.random.split(ks[6], len(num_joint_list))
    p["pos_all"] = jnp.stack(
        [jnp.zeros((J, d), F32).at[:nj].set(0.05 * jax.random.normal(kp[i], (nj, d), F32))
         for i, nj in enumerate(num_joint_list)])        # (n_morph, J, d), zero-padded
    return p


def make_data(key, B, T, J, num_joint_list):
    ks = jax.random.split(key, 3)
    n_morph = len(num_joint_list)
    m_idx = jax.random.randint(ks[0], (B,), 0, n_morph)
    slide_t, hinge_t, glob_t = [], [], []
    for nj in num_joint_list:
        s, h, g = [False] * J, [False] * J, [False] * J
        s[0] = True
        for j in range(1, max(nj - 1, 1)):
            h[j] = True
        g[nj - 1] = True
        slide_t.append(s); hinge_t.append(h); glob_t.append(g)
    slide_t, hinge_t, glob_t = jnp.array(slide_t), jnp.array(hinge_t), jnp.array(glob_t)

    def expand(t):
        return jnp.broadcast_to(t[m_idx][:, None, :], (B, T, J))

    slide_mask, hinge_mask, global_mask = expand(slide_t), expand(hinge_t), expand(glob_t)
    act_mask = slide_mask | hinge_mask
    act = jax.random.normal(ks[1], (B, T, J, 1), F32)
    act_target = jax.random.normal(ks[2], (B, T, J, 1), F32)
    morph_mask = jnp.ones((B, J, J), bool)               # unused: identity encoder (see TODO(synk))
    return dict(act=act, act_target=act_target, slide_mask=slide_mask, hinge_mask=hinge_mask,
                global_mask=global_mask, act_mask=act_mask, morph_mask=morph_mask, m_idx=m_idx)


if __name__ == "__main__":
    B, T, J, d = 16, 4, 4, 128
    num_joint_list = [4, 3]
    num_global_list = [2, 0]                             # second morphology has no global joint

    key = jax.random.PRNGKey(0)
    k_param, k_data = jax.random.split(key)
    params = init_params(k_param, d, num_joint_list, num_global_list, J)
    data = make_data(k_data, B, T, J, num_joint_list)

    y = act_morphology_transformer(params, data, encode_target=False)
    y = jax.block_until_ready(y)

    assert y.shape == (B, T, J, d), y.shape
    yf = y.astype(jnp.float32)
    assert bool(jnp.all(jnp.isfinite(yf)))
    y_ref = reference_forward(params, data, encode_target=False)
    max_err = float(jnp.max(jnp.abs(yf - y_ref)))
    # bf16 output (per perf review): expected rounding error ~1e-3 at these magnitudes.
    assert max_err < 2e-2, max_err
    print("KERNEL_OK")
</pallas_src>

<mosaic_0001>
module attributes {stable_mosaic.version = 11 : i64} {
  func.func @_act_embed_kernel(%arg0: i32, %arg1: memref<16xi32, #tpu.memory_space<smem>>, %arg2: memref<8x16xf32, #tpu.memory_space<vmem>>, %arg3: memref<8x16xi32, #tpu.memory_space<vmem>>, %arg4: memref<8x128xf32, #tpu.memory_space<vmem>>, %arg5: memref<2x4x128xf32, #tpu.memory_space<vmem>>, %arg6: memref<128x128xbf16, #tpu.memory_space<vmem>>) attributes {dimension_semantics = [#tpu.dimension_semantics<parallel>], iteration_bounds = array<i64: 2>, scalar_prefetch = 1 : i64, scratch_operands = 0 : i64, tpu.core_type = #tpu.core_type<tc>, window_params = [{transform_indices = @transform_0, window_bounds = array<i64: 8, 16>}, {transform_indices = @transform_1, window_bounds = array<i64: 8, 16>}, {pipeline_mode = #tpu.pipeline_mode<synchronous>, transform_indices = @transform_2, window_bounds = array<i64: 8, 128>}, {pipeline_mode = #tpu.pipeline_mode<synchronous>, transform_indices = @transform_3, window_bounds = array<i64: 2, 4, 128>}, {transform_indices = @transform_4, window_bounds = array<i64: 128, 128>}]} {
    %c0 = arith.constant 0 : index
    %c0_0 = arith.constant 0 : index
    %0 = vector.load %arg2[%c0, %c0_0] : memref<8x16xf32, #tpu.memory_space<vmem>>, vector<8x16xf32>
    %c0_1 = arith.constant 0 : index
    %c0_2 = arith.constant 0 : index
    %1 = vector.load %arg3[%c0_1, %c0_2] : memref<8x16xi32, #tpu.memory_space<vmem>>, vector<8x16xi32>
    %c1_i32 = arith.constant 1 : i32
    %2 = vector.broadcast %c1_i32 : i32 to vector<8x16xi32>
    %3 = arith.andi %1, %2 : vector<8x16xi32>
    %4 = arith.sitofp %3 : vector<8x16xi32> to vector<8x16xf32>
    %c1_i32_3 = arith.constant 1 : i32
    %5 = vector.broadcast %c1_i32_3 : i32 to vector<8x16xi32>
    %6 = arith.shrsi %1, %5 : vector<8x16xi32>
    %c1_i32_4 = arith.constant 1 : i32
    %7 = vector.broadcast %c1_i32_4 : i32 to vector<8x16xi32>
    %8 = arith.andi %6, %7 : vector<8x16xi32>
    %9 = arith.sitofp %8 : vector<8x16xi32> to vector<8x16xf32>
    %c2_i32 = arith.constant 2 : i32
    %10 = vector.broadcast %c2_i32 : i32 to vector<8x16xi32>
    %11 = arith.shrsi %1, %10 : vector<8x16xi32>
    %c1_i32_5 = arith.constant 1 : i32
    %12 = vector.broadcast %c1_i32_5 : i32 to vector<8x16xi32>
    %13 = arith.andi %11, %12 : vector<8x16xi32>
    %14 = arith.sitofp %13 : vector<8x16xi32> to vector<8x16xf32>
    %c3_i32 = arith.constant 3 : i32
    %15 = vector.broadcast %c3_i32 : i32 to vector<8x16xi32>
    %16 = arith.shrsi %1, %15 : vector<8x16xi32>
    %c1_i32_6 = arith.constant 1 : i32
    %17 = vector.broadcast %c1_i32_6 : i32 to vector<8x16xi32>
    %18 = arith.andi %16, %17 : vector<8x16xi32>
    %19 = arith.sitofp %18 : vector<8x16xi32> to vector<8x16xf32>
    %c4_i32 = arith.constant 4 : i32
    %20 = vector.broadcast %c4_i32 : i32 to vector<8x16xi32>
    %21 = arith.shrsi %1, %20 : vector<8x16xi32>
    %cst = arith.constant 1.000000e+00 : f32
    %22 = vector.broadcast %cst : f32 to vector<8x16xf32>
    %23 = arith.subf %22, %14 : vector<8x16xf32>
    %24 = arith.mulf %9, %23 : vector<8x16xf32>
    %cst_7 = arith.constant 1.000000e+00 : f32
    %25 = vector.broadcast %cst_7 : f32 to vector<8x16xf32>
    %26 = arith.subf %25, %9 : vector<8x16xf32>
    %27 = arith.mulf %4, %26 : vector<8x16xf32>
    %cst_8 = arith.constant 1.000000e+00 : f32
    %28 = vector.broadcast %cst_8 : f32 to vector<8x16xf32>
    %29 = arith.subf %28, %14 : vector<8x16xf32>
    %30 = arith.mulf %27, %29 : vector<8x16xf32>
    %31 = arith.mulf %0, %14 : vector<8x16xf32>
    %32 = arith.mulf %0, %30 : vector<8x16xf32>
    %33 = arith.mulf %0, %24 : vector<8x16xf32>
    %c0_i32 = arith.constant 0 : i32
    %34 = vector.broadcast %c0_i32 : i32 to vector<8x16xi32>
    %35 = arith.cmpi eq, %21, %34 : vector<8x16xi32>
    %36 = arith.extui %35 : vector<8x16xi1> to vector<8x16xi32>
    %37 = arith.sitofp %36 : vector<8x16xi32> to vector<8x16xf32>
    %38 = arith.mulf %31, %37 : vector<8x16xf32>
    %c1_i32_9 = arith.constant 1 : i32
    %39 = vector.broadcast %c1_i32_9 : i32 to vector<8x16xi32>
    %40 = arith.cmpi eq, %21, %39 : vector<8x16xi32>
    %41 = arith.extui %40 : vector<8x16xi1> to vector<8x16xi32>
    %42 = arith.sitofp %41 : vector<8x16xi32> to vector<8x16xf32>
    %43 = arith.mulf %31, %42 : vector<8x16xf32>
    %cst_10 = arith.constant 0.000000e+00 : f32
    %44 = vector.broadcast %cst_10 : f32 to vector<8x16xf32>
    %45 = vector.shape_cast %32 : vector<8x16xf32> to vector<8x16x1xf32>
    %46 = vector.shape_cast %30 : vector<8x16xf32> to vector<8x16x1xf32>
    %47 = vector.shape_cast %33 : vector<8x16xf32> to vector<8x16x1xf32>
    %48 = vector.shape_cast %24 : vector<8x16xf32> to vector<8x16x1xf32>
    %49 = vector.shape_cast %19 : vector<8x16xf32> to vector<8x16x1xf32>
    %50 = vector.shape_cast %38 : vector<8x16xf32> to vector<8x16x1xf32>
    %51 = vector.shape_cast %43 : vector<8x16xf32> to vector<8x16x1xf32>
    %52 = vector.shape_cast %44 : vector<8x16xf32> to vector<8x16x1xf32>
    %53 = tpu.concatenate %45, %46, %47, %48, %49, %50, %51, %52 in 2 : vector<8x16x1xf32>, vector<8x16x1xf32>, vector<8x16x1xf32>, vector<8x16x1xf32>, vector<8x16x1xf32>, vector<8x16x1xf32>, vector<8x16x1xf32>, vector<8x16x1xf32> -> vector<8x16x8xf32>
    %54 = vector.shape_cast %53 : vector<8x16x8xf32> to vector<128x8xf32>
    %c0_11 = arith.constant 0 : index
    %c0_12 = arith.constant 0 : index
    %55 = vector.load %arg4[%c0_11, %c0_12] : memref<8x128xf32, #tpu.memory_space<vmem>>, vector<8x128xf32>
    %cst_13 = arith.constant dense<0.000000e+00> : vector<128x128xf32>
    %56 = tpu.matmul %54, %55, %cst_13 {dimension_numbers = #tpu.dot_dimension_numbers<[1], [0], [0], [1], [0, 0, 1, 1], [], []>} : vector<128x8xf32>, vector<8x128xf32>, vector<128x128xf32> -> vector<128x128xf32>
    %c8_i32 = arith.constant 8 : i32
    %57 = arith.muli %arg0, %c8_i32 : i32
    %c0_i32_14 = arith.constant 0 : i32
    %58 = arith.addi %57, %c0_i32_14 : i32
    %59 = arith.index_cast %58 : i32 to index
    %60 = memref.load %arg1[%59] : memref<16xi32, #tpu.memory_space<smem>>
    %61 = arith.index_cast %60 : i32 to index
    %c0_15 = arith.constant 0 : index
    %c0_16 = arith.constant 0 : index
    %62 = vector.load %arg5[%61, %c0_15, %c0_16] : memref<2x4x128xf32, #tpu.memory_space<vmem>>, vector<1x4x128xf32>
    %63 = vector.shape_cast %62 : vector<1x4x128xf32> to vector<4x128xf32>
    %64 = tpu.concatenate %63, %63, %63, %63 in 0 : vector<4x128xf32>, vector<4x128xf32>, vector<4x128xf32>, vector<4x128xf32> -> vector<16x128xf32>
    %65 = vector.extract_strided_slice %56 {offsets = [0, 0], sizes = [16, 128], strides = [1, 1]} : vector<128x128xf32> to vector<16x128xf32>
    %66 = arith.addf %65, %64 : vector<16x128xf32>
    %67 = arith.truncf %66 : vector<16x128xf32> to vector<16x128xbf16>
    %c0_17 = arith.constant 0 : index
    %c0_18 = arith.constant 0 : index
    %68 = vector.load %arg6[%c0_17, %c0_18] : memref<128x128xbf16, #tpu.memory_space<vmem>>, vector<16x128xbf16>
    tpu.vector_store %arg6[%c0_17, %c0_18], %67 {strides = array<i32>} : memref<128x128xbf16, #tpu.memory_space<vmem>>, vector<16x128xbf16>,
    %c8_i32_19 = arith.constant 8 : i32
    %69 = arith.muli %arg0, %c8_i32_19 : i32
    %c1_i32_20 = arith.constant 1 : i32
    %70 = arith.addi %69, %c1_i32_20 : i32
    %71 = arith.index_cast %70 : i32 to index
    %72 = memref.load %arg1[%71] : memref<16xi32, #tpu.memory_space<smem>>
    %73 = arith.index_cast %72 : i32 to index
    %c0_21 = arith.constant 0 : index
    %c0_22 = arith.constant 0 : index
    %74 = vector.load %arg5[%73, %c0_21, %c0_22] : memref<2x4x128xf32, #tpu.memory_space<vmem>>, vector<1x4x128xf32>
    %75 = vector.shape_cast %74 : vector<1x4x128xf32> to vector<4x128xf32>
    %76 = tpu.concatenate %75, %75, %75, %75 in 0 : vector<4x128xf32>, vector<4x128xf32>, vector<4x128xf32>, vector<4x128xf32> -> vector<16x128xf32>
    %77 = vector.extract_strided_slice %56 {offsets = [16, 0], sizes = [16, 128], strides = [1, 1]} : vector<128x128xf32> to vector<16x128xf32>
    %78 = arith.addf %77, %76 : vector<16x128xf32>
    %79 = arith.truncf %78 : vector<16x128xf32> to vector<16x128xbf16>
    %c16 = arith.constant 16 : index
    %c0_23 = arith.constant 0 : index
    %80 = vector.load %arg6[%c16, %c0_23] : memref<128x128xbf16, #tpu.memory_space<vmem>>, vector<16x128xbf16>
    tpu.vector_store %arg6[%c16, %c0_23], %79 {strides = array<i32>} : memref<128x128xbf16, #tpu.memory_space<vmem>>, vector<16x128xbf16>,
    %c8_i32_24 = arith.constant 8 : i32
    %81 = arith.muli %arg0, %c8_i32_24 : i32
    %c2_i32_25 = arith.constant 2 : i32
    %82 = arith.addi %81, %c2_i32_25 : i32
    %83 = arith.index_cast %82 : i32 to index
    %84 = memref.load %arg1[%83] : memref<16xi32, #tpu.memory_space<smem>>
    %85 = arith.index_cast %84 : i32 to index
    %c0_26 = arith.constant 0 : index
    %c0_27 = arith.constant 0 : index
    %86 = vector.load %arg5[%85, %c0_26, %c0_27] : memref<2x4x128xf32, #tpu.memory_space<vmem>>, vector<1x4x128xf32>
    %87 = vector.shape_cast %86 : vector<1x4x128xf32> to vector<4x128xf32>
    %88 = tpu.concatenate %87, %87, %87, %87 in 0 : vector<4x128xf32>, vector<4x128xf32>, vector<4x128xf32>, vector<4x128xf32> -> vector<16x128xf32>
    %89 = vector.extract_strided_slice %56 {offsets = [32, 0], sizes = [16, 128], strides = [1, 1]} : vector<128x128xf32> to vector<16x128xf32>
    %90 = arith.addf %89, %88 : vector<16x128xf32>
    %91 = arith.truncf %90 : vector<16x128xf32> to vector<16x128xbf16>
    %c32 = arith.constant 32 : index
    %c0_28 = arith.constant 0 : index
    %92 = vector.load %arg6[%c32, %c0_28] : memref<128x128xbf16, #tpu.memory_space<vmem>>, vector<16x128xbf16>
    tpu.vector_store %arg6[%c32, %c0_28], %91 {strides = array<i32>} : memref<128x128xbf16, #tpu.memory_space<vmem>>, vector<16x128xbf16>,
    %c8_i32_29 = arith.constant 8 : i32
    %93 = arith.muli %arg0, %c8_i32_29 : i32
    %c3_i32_30 = arith.constant 3 : i32
    %94 = arith.addi %93, %c3_i32_30 : i32
    %95 = arith.index_cast %94 : i32 to index
    %96 = memref.load %arg1[%95] : memref<16xi32, #tpu.memory_space<smem>>
    %97 = arith.index_cast %96 : i32 to index
    %c0_31 = arith.constant 0 : index
    %c0_32 = arith.constant 0 : index
    %98 = vector.load %arg5[%97, %c0_31, %c0_32] : memref<2x4x128xf32, #tpu.memory_space<vmem>>, vector<1x4x128xf32>
    %99 = vector.shape_cast %98 : vector<1x4x128xf32> to vector<4x128xf32>
    %100 = tpu.concatenate %99, %99, %99, %99 in 0 : vector<4x128xf32>, vector<4x128xf32>, vector<4x128xf32>, vector<4x128xf32> -> vector<16x128xf32>
    %101 = vector.extract_strided_slice %56 {offsets = [48, 0], sizes = [16, 128], strides = [1, 1]} : vector<128x128xf32> to vector<16x128xf32>
    %102 = arith.addf %101, %100 : vector<16x128xf32>
    %103 = arith.truncf %102 : vector<16x128xf32> to vector<16x128xbf16>
    %c48 = arith.constant 48 : index
    %c0_33 = arith.constant 0 : index
    %104 = vector.load %arg6[%c48, %c0_33] : memref<128x128xbf16, #tpu.memory_space<vmem>>, vector<16x128xbf16>
    tpu.vector_store %arg6[%c48, %c0_33], %103 {strides = array<i32>} : memref<128x128xbf16, #tpu.memory_space<vmem>>, vector<16x128xbf16>,
    %c8_i32_34 = arith.constant 8 : i32
    %105 = arith.muli %arg0, %c8_i32_34 : i32
    %c4_i32_35 = arith.constant 4 : i32
    %106 = arith.addi %105, %c4_i32_35 : i32
    %107 = arith.index_cast %106 : i32 to index
    %108 = memref.load %arg1[%107] : memref<16xi32, #tpu.memory_space<smem>>
    %109 = arith.index_cast %108 : i32 to index
    %c0_36 = arith.constant 0 : index
    %c0_37 = arith.constant 0 : index
    %110 = vector.load %arg5[%109, %c0_36, %c0_37] : memref<2x4x128xf32, #tpu.memory_space<vmem>>, vector<1x4x128xf32>
    %111 = vector.shape_cast %110 : vector<1x4x128xf32> to vector<4x128xf32>
    %112 = tpu.concatenate %111, %111, %111, %111 in 0 : vector<4x128xf32>, vector<4x128xf32>, vector<4x128xf32>, vector<4x128xf32> -> vector<16x128xf32>
    %113 = vector.extract_strided_slice %56 {offsets = [64, 0], sizes = [16, 128], strides = [1, 1]} : vector<128x128xf32> to vector<16x128xf32>
    %114 = arith.addf %113, %112 : vector<16x128xf32>
    %115 = arith.truncf %114 : vector<16x128xf32> to vector<16x128xbf16>
    %c64 = arith.constant 64 : index
    %c0_38 = arith.constant 0 : index
    %116 = vector.load %arg6[%c64, %c0_38] : memref<128x128xbf16, #tpu.memory_space<vmem>>, vector<16x128xbf16>
    tpu.vector_store %arg6[%c64, %c0_38], %115 {strides = array<i32>} : memref<128x128xbf16, #tpu.memory_space<vmem>>, vector<16x128xbf16>,
    %c8_i32_39 = arith.constant 8 : i32
    %117 = arith.muli %arg0, %c8_i32_39 : i32
    %c5_i32 = arith.constant 5 : i32
    %118 = arith.addi %117, %c5_i32 : i32
    %119 = arith.index_cast %118 : i32 to index
    %120 = memref.load %arg1[%119] : memref<16xi32, #tpu.memory_space<smem>>
    %121 = arith.index_cast %120 : i32 to index
    %c0_40 = arith.constant 0 : index
    %c0_41 = arith.constant 0 : index
    %122 = vector.load %arg5[%121, %c0_40, %c0_41] : memref<2x4x128xf32, #tpu.memory_space<vmem>>, vector<1x4x128xf32>
    %123 = vector.shape_cast %122 : vector<1x4x128xf32> to vector<4x128xf32>
    %124 = tpu.concatenate %123, %123, %123, %123 in 0 : vector<4x128xf32>, vector<4x128xf32>, vector<4x128xf32>, vector<4x128xf32> -> vector<16x128xf32>
    %125 = vector.extract_strided_slice %56 {offsets = [80, 0], sizes = [16, 128], strides = [1, 1]} : vector<128x128xf32> to vector<16x128xf32>
    %126 = arith.addf %125, %124 : vector<16x128xf32>
    %127 = arith.truncf %126 : vector<16x128xf32> to vector<16x128xbf16>
    %c80 = arith.constant 80 : index
    %c0_42 = arith.constant 0 : index
    %128 = vector.load %arg6[%c80, %c0_42] : memref<128x128xbf16, #tpu.memory_space<vmem>>, vector<16x128xbf16>
    tpu.vector_store %arg6[%c80, %c0_42], %127 {strides = array<i32>} : memref<128x128xbf16, #tpu.memory_space<vmem>>, vector<16x128xbf16>,
    %c8_i32_43 = arith.constant 8 : i32
    %129 = arith.muli %arg0, %c8_i32_43 : i32
    %c6_i32 = arith.constant 6 : i32
    %130 = arith.addi %129, %c6_i32 : i32
    %131 = arith.index_cast %130 : i32 to index
    %132 = memref.load %arg1[%131] : memref<16xi32, #tpu.memory_space<smem>>
    %133 = arith.index_cast %132 : i32 to index
    %c0_44 = arith.constant 0 : index
    %c0_45 = arith.constant 0 : index
    %134 = vector.load %arg5[%133, %c0_44, %c0_45] : memref<2x4x128xf32, #tpu.memory_space<vmem>>, vector<1x4x128xf32>
    %135 = vector.shape_cast %134 : vector<1x4x128xf32> to vector<4x128xf32>
    %136 = tpu.concatenate %135, %135, %135, %135 in 0 : vector<4x128xf32>, vector<4x128xf32>, vector<4x128xf32>, vector<4x128xf32> -> vector<16x128xf32>
    %137 = vector.extract_strided_slice %56 {offsets = [96, 0], sizes = [16, 128], strides = [1, 1]} : vector<128x128xf32> to vector<16x128xf32>
    %138 = arith.addf %137, %136 : vector<16x128xf32>
    %139 = arith.truncf %138 : vector<16x128xf32> to vector<16x128xbf16>
    %c96 = arith.constant 96 : index
    %c0_46 = arith.constant 0 : index
    %140 = vector.load %arg6[%c96, %c0_46] : memref<128x128xbf16, #tpu.memory_space<vmem>>, vector<16x128xbf16>
    tpu.vector_store %arg6[%c96, %c0_46], %139 {strides = array<i32>} : memref<128x128xbf16, #tpu.memory_space<vmem>>, vector<16x128xbf16>,
    %c8_i32_47 = arith.constant 8 : i32
    %141 = arith.muli %arg0, %c8_i32_47 : i32
    %c7_i32 = arith.constant 7 : i32
    %142 = arith.addi %141, %c7_i32 : i32
    %143 = arith.index_cast %142 : i32 to index
    %144 = memref.load %arg1[%143] : memref<16xi32, #tpu.memory_space<smem>>
    %145 = arith.index_cast %144 : i32 to index
    %c0_48 = arith.constant 0 : index
    %c0_49 = arith.constant 0 : index
    %146 = vector.load %arg5[%145, %c0_48, %c0_49] : memref<2x4x128xf32, #tpu.memory_space<vmem>>, vector<1x4x128xf32>
    %147 = vector.shape_cast %146 : vector<1x4x128xf32> to vector<4x128xf32>
    %148 = tpu.concatenate %147, %147, %147, %147 in 0 : vector<4x128xf32>, vector<4x128xf32>, vector<4x128xf32>, vector<4x128xf32> -> vector<16x128xf32>
    %149 = vector.extract_strided_slice %56 {offsets = [112, 0], sizes = [16, 128], strides = [1, 1]} : vector<128x128xf32> to vector<16x128xf32>
    %150 = arith.addf %149, %148 : vector<16x128xf32>
    %151 = arith.truncf %150 : vector<16x128xf32> to vector<16x128xbf16>
    %c112 = arith.constant 112 : index
    %c0_50 = arith.constant 0 : index
    %152 = vector.load %arg6[%c112, %c0_50] : memref<128x128xbf16, #tpu.memory_space<vmem>>, vector<16x128xbf16>
    tpu.vector_store %arg6[%c112, %c0_50], %151 {strides = array<i32>} : memref<128x128xbf16, #tpu.memory_space<vmem>>, vector<16x128xbf16>,
    return
  }
  func.func @transform_0(%arg0: i32, %arg1: memref<16xi32, #tpu.memory_space<smem>>) -> (i32, i32) {
    %c0_i32 = arith.constant 0 : i32
    %c0_i32_0 = arith.constant 0 : i32
    return %arg0, %c0_i32 : i32, i32
  }
  func.func @transform_1(%arg0: i32, %arg1: memref<16xi32, #tpu.memory_space<smem>>) -> (i32, i32) {
    %c0_i32 = arith.constant 0 : i32
    %c0_i32_0 = arith.constant 0 : i32
    return %arg0, %c0_i32 : i32, i32
  }
  func.func @transform_2(%arg0: i32, %arg1: memref<16xi32, #tpu.memory_space<smem>>) -> (i32, i32) {
    %c0_i32 = arith.constant 0 : i32
    %c0_i32_0 = arith.constant 0 : i32
    %c0_i32_1 = arith.constant 0 : i32
    return %c0_i32, %c0_i32_0 : i32, i32
  }
  func.func @transform_3(%arg0: i32, %arg1: memref<16xi32, #tpu.memory_space<smem>>) -> (i32, i32, i32) {
    %c0_i32 = arith.constant 0 : i32
    %c0_i32_0 = arith.constant 0 : i32
    %c0_i32_1 = arith.constant 0 : i32
    %c0_i32_2 = arith.constant 0 : i32
    return %c0_i32, %c0_i32_0, %c0_i32_1 : i32, i32, i32
  }
  func.func @transform_4(%arg0: i32, %arg1: memref<16xi32, #tpu.memory_space<smem>>) -> (i32, i32) {
    %c0_i32 = arith.constant 0 : i32
    %c0_i32_0 = arith.constant 0 : i32
    return %arg0, %c0_i32 : i32, i32
  }
}

</mosaic_0001>

<llo_original>
// kernel: tpu_custom_call.1
$region0: #{tpu_custom_call.1}
  #allocation0 [shape = 'u32[]', space=smem, size = 0x4, offset = 0x4, fixed_abs, tag = 'smem constant byte address 0x4 - core index']
  #allocation1 [shape = 'u32[144,128]{1,0:T(1,128)}', space=vmem, size = 0x12000, scoped, tag = 'internal scratch']
  #allocation2 [shape = 's32[1]{0}', space=sflag, size = 0x4, scoped, tag = 'scoped memory for tpu_custom_call.1']
  #allocation3 [shape = 'u8[512]{0}', space=smem, size = 0x200, scoped, tag = 'prefetched SMEM operand 0']
  %s0 = inlined_call_operand.hbm [shape: s32[16], index: 0, kind: input, shape index: {}]
  %s1 = inlined_call_operand.hbm [shape: f32[16,16], index: 1, kind: input, shape index: {}]
  %s2 = inlined_call_operand.hbm [shape: s32[16,16], index: 2, kind: input, shape index: {}]
  %s3 = inlined_call_operand.vmem [shape: f32[8,128], index: 3, kind: input, shape index: {}]
  %s4 = inlined_call_operand.hbm [shape: f32[2,4,128], index: 4, kind: input, shape index: {}]
  %s5 = inlined_call_operand.hbm [shape: bf16[256,128], index: 5, kind: output, shape index: {}]
  %s6 = sld [smem:[#allocation0]]
  $region61: #{tpu_custom_call.1} parent=0
    _
  %s8 = ssub.s32 1, %s6
  %s9 = scalar_select 0, %s8, %s6
  %11 = dma.hbm_to_smem %s0, 16, [#allocation3], [#allocation2]
  %12 = dma.done [#allocation2], 16
  %13 = sfence
  $region1: #{tpu_custom_call.1} parent=0
    #allocation4 [shape = 'u8[8192]{0}', space=vmem, size = 0x2000, scoped, tag = 'input window, operand 1']
    #allocation5 [shape = 's32[2]{0}', space=sflag, size = 0x8, scoped, tag = 'scoped memory for tpu_custom_call.1']
    #allocation6 [shape = 's32[2]{0}', space=sflag, size = 0x8, scoped, tag = 'scoped memory for tpu_custom_call.1']
    #allocation7 [shape = 'u8[8192]{0}', space=vmem, size = 0x2000, scoped, tag = 'input window, operand 2']
    #allocation8 [shape = 's32[2]{0}', space=sflag, size = 0x8, scoped, tag = 'scoped memory for tpu_custom_call.1']
    #allocation9 [shape = 'u8[4096]{0}', space=vmem, size = 0x1000, scoped, tag = 'input window, operand 4, single buffered']
    #allocation10 [shape = 'u8[65536]{0}', space=vmem, size = 0x10000, scoped, tag = 'output window, operand 0']
    %14 = vsyncpa [#allocation5], 0
    %s15 = scalar_lea.sflag [#allocation5], 1
    %16 = vsyncpa %s15, 0
    %17 = vsyncpa [#allocation8], 0
    %s18 = scalar_lea.sflag [#allocation8], 1
    %19 = vsyncpa %s18, 0
    %20 = vsyncpa [#allocation6], 0
    %s21 = scalar_lea.sflag [#allocation6], 1
    %22 = vsyncpa %s21, 0
    loop: start=0, step=1, limit=4
    $region2: #{tpu_custom_call.1} parent=1 // loop_pre_header
      _
    $region3: #{tpu_custom_call.1} parent=1 // loop_header
      %s24 = sphi 0, %s28
      %p25 = scmp.ge.s32.totalorder %s24, 4
      %s34 = sphi 0, %s36
      %s37 = sphi 0, %s34
      %s38 = sphi 0, %s37
      %s54 = sphi 0, %s38
      %s60 = sphi 0, %s62
      %s63 = sphi 0, %s60
      %s64 = sphi 0, %s63
      %s80 = sphi 0, %s64
      %s84 = sphi 0, %s84
      %s86 = sphi 0, %s84
      %s87 = sphi 0, %s86
      %s101 = sphi 0, %s87
      %s105 = sphi 0, %s105
      %s107 = sphi 0, %s105
      %s108 = sphi 0, %s107
      %s122 = sphi 0, %s108
      %s128 = sphi 0, %s130
      %s131 = sphi 0, %s128
      %s132 = sphi 0, %s131
      %s148 = sphi 0, %s132
    $region4: #{tpu_custom_call.1} parent=1 // loop_header_branch
      %27 = sbr.rel (%p25) target = $region8
    $region5: #{tpu_custom_call.1} parent=1 // loop_body
      %s29 = ssub.s32 %s24, 1
      %s30 = ssub.s32 %s24, 2
      %s31 = sadd.s32 %s24, 1
      %s32 = ssub.s32 %s24, %s31
      %p33 = scmp.eq.s32.totalorder %s32, 0
      %s35 = sadd.s32 %s34, 1
      %s36 = scalar_select %p33, %s34, %s35
      %p39 = pneg %p33
      %p40 = scmp.eq.s32.totalorder %s24, 1
      %p41 = por %p39, %p40
      %p42 = scmp.ne.s32.totalorder %s34, %s37
      %p43 = scmp.eq.s32.totalorder %s24, 0
      %p44 = por %p42, %p43
      %p45 = scmp.ne.s32.totalorder %s34, %s37
      %p46 = scmp.eq.s32.totalorder %s29, 1
      %p47 = por %p45, %p46
      %p48 = scmp.ne.s32.totalorder %s37, %s38
      %p49 = scmp.eq.s32.totalorder %s29, 0
      %p50 = por %p48, %p49
      %p51 = scmp.ne.s32.totalorder %s37, %s38
      %p52 = scmp.eq.s32.totalorder %s30, 1
      %p53 = por %p51, %p52
      %p55 = scmp.ne.s32.totalorder %s38, %s54
      %p56 = scmp.eq.s32.totalorder %s30, 0
      %p57 = por %p55, %p56
      %s58 = ssub.s32 %s24, %s31
      %p59 = scmp.eq.s32.totalorder %s58, 0
      %s61 = sadd.s32 %s60, 1
      %s62 = scalar_select %p59, %s60, %s61
      %p65 = pneg %p59
      %p66 = scmp.eq.s32.totalorder %s24, 1
      %p67 = por %p65, %p66
      %p68 = scmp.ne.s32.totalorder %s60, %s63
      %p69 = scmp.eq.s32.totalorder %s24, 0
      %p70 = por %p68, %p69
      %p71 = scmp.ne.s32.totalorder %s60, %s63
      %p72 = scmp.eq.s32.totalorder %s29, 1
      %p73 = por %p71, %p72
      %p74 = scmp.ne.s32.totalorder %s63, %s64
      %p75 = scmp.eq.s32.totalorder %s29, 0
      %p76 = por %p74, %p75
      %p77 = scmp.ne.s32.totalorder %s63, %s64
      %p78 = scmp.eq.s32.totalorder %s30, 1
      %p79 = por %p77, %p78
      %p81 = scmp.ne.s32.totalorder %s64, %s80
      %p82 = scmp.eq.s32.totalorder %s30, 0
      %p83 = por %p81, %p82
      %s85 = sadd.s32 %s84, 1
      %p88 = scmp.eq.s32.totalorder %s24, 1
      %p89 = scmp.ne.s32.totalorder %s84, %s86
      %p90 = scmp.eq.s32.totalorder %s24, 0
      %p91 = por %p89, %p90
      %p92 = scmp.ne.s32.totalorder %s84, %s86
      %p93 = scmp.eq.s32.totalorder %s29, 1
      %p94 = por %p92, %p93
      %p95 = scmp.ne.s32.totalorder %s86, %s87
      %p96 = scmp.eq.s32.totalorder %s29, 0
      %p97 = por %p95, %p96
      %p98 = scmp.ne.s32.totalorder %s86, %s87
      %p99 = scmp.eq.s32.totalorder %s30, 1
      %p100 = por %p98, %p99
      %p102 = scmp.ne.s32.totalorder %s87, %s101
      %p103 = scmp.eq.s32.totalorder %s30, 0
      %p104 = por %p102, %p103
      %s106 = sadd.s32 %s105, 1
      %p109 = scmp.eq.s32.totalorder %s24, 1
      %p110 = scmp.ne.s32.totalorder %s105, %s107
      %p111 = scmp.eq.s32.totalorder %s24, 0
      %p112 = por %p110, %p111
      %p113 = scmp.ne.s32.totalorder %s105, %s107
      %p114 = scmp.eq.s32.totalorder %s29, 1
      %p115 = por %p113, %p114
      %p116 = scmp.ne.s32.totalorder %s107, %s108
      %p117 = scmp.eq.s32.totalorder %s29, 0
      %p118 = por %p116, %p117
      %p119 = scmp.ne.s32.totalorder %s107, %s108
      %p120 = scmp.eq.s32.totalorder %s30, 1
      %p121 = por %p119, %p120
      %p123 = scmp.ne.s32.totalorder %s108, %s122
      %p124 = scmp.eq.s32.totalorder %s30, 0
      %p125 = por %p123, %p124
      %s126 = ssub.s32 %s24, %s31
      %p127 = scmp.eq.s32.totalorder %s126, 0
      %s129 = sadd.s32 %s128, 1
      %s130 = scalar_select %p127, %s128, %s129
      %p133 = pneg %p127
      %p134 = scmp.eq.s32.totalorder %s24, 1
      %p135 = por %p133, %p134
      %p136 = scmp.ne.s32.totalorder %s128, %s131
      %p137 = scmp.eq.s32.totalorder %s24, 0
      %p138 = por %p136, %p137
      %p139 = scmp.ne.s32.totalorder %s128, %s131
      %p140 = scmp.eq.s32.totalorder %s29, 1
      %p141 = por %p139, %p140
      %p142 = scmp.ne.s32.totalorder %s131, %s132
      %p143 = scmp.eq.s32.totalorder %s29, 0
      %p144 = por %p142, %p143
      %p145 = scmp.ne.s32.totalorder %s131, %s132
      %p146 = scmp.eq.s32.totalorder %s30, 1
      %p147 = por %p145, %p146
      %p149 = scmp.ne.s32.totalorder %s132, %s148
      %p150 = scmp.eq.s32.totalorder %s30, 0
      %p151 = por %p149, %p150
      %p152 = scmp.le.s32.totalorder 1, %s24
      %p153 = scmp.lt.s32.totalorder %s24, 3
      %p154 = pnand %p152, %p153
      %p155 = pneg %p154
      // Predicated region
      $region9: #{tpu_custom_call.1} parent=5 // pred_check
        _
      $region10: #{tpu_custom_call.1} parent=5 // pred_check_branch
        %157 = sbr.rel (%p154) target = $region12
      $region11: #{tpu_custom_call.1} parent=5 // pred_region
        %s158 = ssub.s32 %s24, 1
        // Predicated region
        $region13: #{tpu_custom_call.1} parent=11 // pred_check
          %p159 = pneg %p97
        $region14: #{tpu_custom_call.1} parent=11 // pred_check_branch
          %161 = sbr.rel (%p159) target = $region16
        $region15: #{tpu_custom_call.1} parent=11 // pred_region
          _
        $region16: #{tpu_custom_call.1} parent=11 // pred_fallthru
          _
        // Predicated region
        $region17: #{tpu_custom_call.1} parent=11 // pred_check
          %p162 = pneg %p118
        $region18: #{tpu_custom_call.1} parent=11 // pred_check_branch
          %164 = sbr.rel (%p162) target = $region20
        $region19: #{tpu_custom_call.1} parent=11 // pred_region
          %s166 = ssub.s32 128, 128
          %167 = vsyncadd [#allocation8], %s166
          %s168 = sshll.u32 [#allocation9], 4
          %s169 = int_to_ptr.vmem [resolvable:$true] %s168
          %174 = dma.hbm_to_vmem [thread:$0]  %s4, 128, %s169, [#allocation8], 64, 64, 4
        $region20: #{tpu_custom_call.1} parent=11 // pred_fallthru
          _
      $region12: #{tpu_custom_call.1} parent=5 // pred_fallthru
        _
      %p175 = scmp.lt.s32.totalorder %s24, 2
      // Predicated region
      $region21: #{tpu_custom_call.1} parent=5 // pred_check
        %p176 = pneg %p175
      $region22: #{tpu_custom_call.1} parent=5 // pred_check_branch
        %178 = sbr.rel (%p176) target = $region24
      $region23: #{tpu_custom_call.1} parent=5 // pred_region
        // Predicated region
        $region25: #{tpu_custom_call.1} parent=23 // pred_check
          %p179 = pneg %p44
        $region26: #{tpu_custom_call.1} parent=23 // pred_check_branch
          %181 = sbr.rel (%p179) target = $region28
        $region27: #{tpu_custom_call.1} parent=23 // pred_region
          %s182 = sand.u32 %s34, 1
          %s183 = scalar_lea.sflag [#allocation5], %s182
          %s184 = sand.u32 %s34, 1
          %s185 = smul.addr %s184, 8
          %s186 = scalar_lea.vmem [#allocation4], %s185
          %s188 = ssub.s32 128, 128
          %189 = vsyncadd %s183, %s188
          %s190 = smul.addr %s24, 128
          %s191 = scalar_lea.hbm %s1, %s190
          %s193 = sshll.u32 %s186, 4
          %s194 = int_to_ptr.vmem [resolvable:$true] %s193
          %196 = dma.hbm_to_vmem [thread:$0]  %s191, 128, %s194, %s183
        $region28: #{tpu_custom_call.1} parent=23 // pred_fallthru
          _
        // Predicated region
        $region29: #{tpu_custom_call.1} parent=23 // pred_check
          %p197 = pneg %p70
        $region30: #{tpu_custom_call.1} parent=23 // pred_check_branch
          %199 = sbr.rel (%p197) target = $region32
        $region31: #{tpu_custom_call.1} parent=23 // pred_region
          %s200 = sand.u32 %s24, 1
          %s201 = scalar_lea.sflag [#allocation8], %s200
          %s202 = sand.u32 %s60, 1
          %s203 = smul.addr %s202, 8
          %s204 = scalar_lea.vmem [#allocation7], %s203
          %s206 = ssub.s32 128, 128
          %207 = vsyncadd %s201, %s206
          %s208 = smul.addr %s24, 128
          %s209 = scalar_lea.hbm %s2, %s208
          %s211 = sshll.u32 %s204, 4
          %s212 = int_to_ptr.vmem [resolvable:$true] %s211
          %214 = dma.hbm_to_vmem [thread:$0]  %s209, 128, %s212, %s201
        $region32: #{tpu_custom_call.1} parent=23 // pred_fallthru
          _
      $region24: #{tpu_custom_call.1} parent=5 // pred_fallthru
        _
      %p215 = scmp.le.s32.totalorder 1, %s24
      %p216 = scmp.lt.s32.totalorder %s24, 3
      %p217 = pnand %p215, %p216
      %p218 = pneg %p217
      // Predicated region
      $region33: #{tpu_custom_call.1} parent=5 // pred_check
        _
      $region34: #{tpu_custom_call.1} parent=5 // pred_check_branch
        %220 = sbr.rel (%p217) target = $region36
      $region35: #{tpu_custom_call.1} parent=5 // pred_region
        %s221 = ssub.s32 %s24, 1
        %s222 = sand.u32 %s37, 1
        %s223 = scalar_lea.sflag [#allocation5], %s222
        %s224 = sand.u32 %s37, 1
        %s225 = smul.addr %s224, 8
        %s226 = scalar_lea.vmem [#allocation4], %s225
        // Predicated region
        $region37: #{tpu_custom_call.1} parent=35 // pred_check
          %p227 = pneg %p50
        $region38: #{tpu_custom_call.1} parent=35 // pred_check_branch
          %229 = sbr.rel (%p227) target = $region40
        $region39: #{tpu_custom_call.1} parent=35 // pred_region
          %230 = dma.done %s223, 128
        $region40: #{tpu_custom_call.1} parent=35 // pred_fallthru
          _
        %s231 = sand.u32 %s29, 1
        %s232 = scalar_lea.sflag [#allocation8], %s231
        %s233 = sand.u32 %s63, 1
        %s234 = smul.addr %s233, 8
        %s235 = scalar_lea.vmem [#allocation7], %s234
        // Predicated region
        $region41: #{tpu_custom_call.1} parent=35 // pred_check
          %p236 = pneg %p76
        $region42: #{tpu_custom_call.1} parent=35 // pred_check_branch
          %238 = sbr.rel (%p236) target = $region44
        $region43: #{tpu_custom_call.1} parent=35 // pred_region
          %239 = dma.done %s232, 128
        $region44: #{tpu_custom_call.1} parent=35 // pred_fallthru
          _
        // Predicated region
        $region45: #{tpu_custom_call.1} parent=35 // pred_check
          %p240 = pneg %p118
        $region46: #{tpu_custom_call.1} parent=35 // pred_check_branch
          %242 = sbr.rel (%p240) target = $region48
        $region47: #{tpu_custom_call.1} parent=35 // pred_region
          %243 = dma.done [#allocation8], 128
        $region48: #{tpu_custom_call.1} parent=35 // pred_fallthru
          _
        %s244 = sand.u32 %s37, 1
        %s245 = scalar_lea.sflag [#allocation5], %s244
        %s246 = sand.u32 %s37, 1
        %s247 = smul.addr %s246, 8
        %s248 = scalar_lea.vmem [#allocation4], %s247
        %p249 = pneg %p50
        %p250 = pneg %p47
        %s251 = sand.u32 %s29, 1
        %s252 = scalar_lea.sflag [#allocation8], %s251
        %s253 = sand.u32 %s63, 1
        %s254 = smul.addr %s253, 8
        %s255 = scalar_lea.vmem [#allocation7], %s254
        %p256 = pneg %p76
        %p257 = pneg %p73
        %p258 = pneg %p97
        %p259 = pneg %p94
        %p260 = pneg %p118
        %p261 = pneg %p115
        %p262 = pneg %p144
        %p263 = pneg %p141
        %s264 = sand.u32 %s131, 1
        %s265 = scalar_lea.sflag [#allocation6], %s264
        %s266 = sand.u32 %s131, 1
        %s267 = smul.addr %s266, 64
        %s268 = scalar_lea.vmem [#allocation10], %s267
        %s269 = smul.u32 16, %s29
        %v270 = vld [vmem:[%s226] sm:$0xff]
        %v271 = vld [vmem:[%s235] sm:$0xff]
        %v272 = vand.u32 %v271, 1
        %v273 = vcvt.s32.f32 %v272
        %v274 = vshra.s32 %v271, 1
        %v275 = vand.u32 %v274, 1
        %v276 = vcvt.s32.f32 %v275
        %v277 = vshra.s32 %v271, 2
        %v278 = vand.u32 %v277, 1
        %v279 = vcvt.s32.f32 %v278
        %v280 = vshra.s32 %v271, 3
        %v281 = vand.u32 %v280, 1
        %v282 = vcvt.s32.f32 %v281
        %v283 = vshra.s32 %v271, 4
        %v284 = vsub.f32 1.0, %v279
        %v285 = vmul.f32 %v276, %v284
        %v286 = vsub.f32 1.0, %v276
        %v287 = vmul.f32 %v273, %v286
        %v288 = vmul.f32 %v287, %v284
        %v289 = vmul.f32 %v270, %v279
        %v290 = vmul.f32 %v270, %v288
        %v291 = vmul.f32 %v270, %v285
        %vm292 = vcmp.eq.s32.totalorder %v283, 0
        %v293 = vsel %vm292, 1, 0
        %v294 = vcvt.s32.f32 %v293
        %v295 = vmul.f32 %v289, %v294
        %vm296 = vcmp.eq.s32.totalorder %v283, 1
        %v297 = vsel %vm296, 1, 0
        %v298 = vcvt.s32.f32 %v297
        %v299 = vmul.f32 %v289, %v298
        %v300 = vlaneseq
        %v301 = vshrl.u32 %v300, 7
        %v302 = vsub.s32 0, %v301
        %v303 = vrot.slane %v290, %v302
        %305 = vbcast.lane.b32.xlu0 %v303, 256
        %v306 = vpop.permute.xlu0 %305
        %s308 = sor.u32 256, 8
        %309 = vbcast.lane.b32.xlu0 %v303, %s308
        %v310 = vpop.permute.xlu0 %309
        %v311 = vlaneseq
        %v312 = vshrl.u32 %v311, 7
        %v313 = vsub.s32 1, %v312
        %v314 = vrot.slane %v290, %v313
        %316 = vbcast.lane.b32.xlu0 %v314, 256
        %v317 = vpop.permute.xlu0 %316
        %s319 = sor.u32 256, 8
        %320 = vbcast.lane.b32.xlu0 %v314, %s319
        %v321 = vpop.permute.xlu0 %320
        %v322 = vlaneseq
        %v323 = vshrl.u32 %v322, 7
        %v324 = vsub.s32 2, %v323
        %v325 = vrot.slane %v290, %v324
        %327 = vbcast.lane.b32.xlu0 %v325, 256
        %v328 = vpop.permute.xlu0 %327
        %s330 = sor.u32 256, 8
        %331 = vbcast.lane.b32.xlu0 %v325, %s330
        %v332 = vpop.permute.xlu0 %331
        %v333 = vlaneseq
        %v334 = vshrl.u32 %v333, 7
        %v335 = vsub.s32 3, %v334
        %v336 = vrot.slane %v290, %v335
        %338 = vbcast.lane.b32.xlu0 %v336, 256
        %v339 = vpop.permute.xlu0 %338
        %s341 = sor.u32 256, 8
        %342 = vbcast.lane.b32.xlu0 %v336, %s341
        %v343 = vpop.permute.xlu0 %342
        %v344 = vlaneseq
        %v345 = vshrl.u32 %v344, 7
        %v346 = vsub.s32 4, %v345
        %v347 = vrot.slane %v290, %v346
        %349 = vbcast.lane.b32.xlu0 %v347, 256
        %v350 = vpop.permute.xlu0 %349
        %s352 = sor.u32 256, 8
        %353 = vbcast.lane.b32.xlu0 %v347, %s352
        %v354 = vpop.permute.xlu0 %353
        %v355 = vlaneseq
        %v356 = vshrl.u32 %v355, 7
        %v357 = vsub.s32 5, %v356
        %v358 = vrot.slane %v290, %v357
        %360 = vbcast.lane.b32.xlu0 %v358, 256
        %v361 = vpop.permute.xlu0 %360
        %s363 = sor.u32 256, 8
        %364 = vbcast.lane.b32.xlu0 %v358, %s363
        %v365 = vpop.permute.xlu0 %364
        %v366 = vlaneseq
        %v367 = vshrl.u32 %v366, 7
        %v368 = vsub.s32 6, %v367
        %v369 = vrot.slane %v290, %v368
        %371 = vbcast.lane.b32.xlu0 %v369, 256
        %v372 = vpop.permute.xlu0 %371
        %s374 = sor.u32 256, 8
        %375 = vbcast.lane.b32.xlu0 %v369, %s374
        %v376 = vpop.permute.xlu0 %375
        %v377 = vlaneseq
        %v378 = vshrl.u32 %v377, 7
        %v379 = vsub.s32 7, %v378
        %v380 = vrot.slane %v290, %v379
        %382 = vbcast.lane.b32.xlu0 %v380, 256
        %v383 = vpop.permute.xlu0 %382
        %s385 = sor.u32 256, 8
        %386 = vbcast.lane.b32.xlu0 %v380, %s385
        %v387 = vpop.permute.xlu0 %386
        %v388 = vlaneseq
        %v389 = vshrl.u32 %v388, 7
        %v390 = vsub.s32 0, %v389
        %v391 = vrot.slane %v288, %v390
        %393 = vbcast.lane.b32.xlu0 %v391, 256
        %v394 = vpop.permute.xlu0 %393
        %s396 = sor.u32 256, 8
        %397 = vbcast.lane.b32.xlu0 %v391, %s396
        %v398 = vpop.permute.xlu0 %397
        %v399 = vlaneseq
        %v400 = vshrl.u32 %v399, 7
        %v401 = vsub.s32 1, %v400
        %v402 = vrot.slane %v288, %v401
        %404 = vbcast.lane.b32.xlu0 %v402, 256
        %v405 = vpop.permute.xlu0 %404
        %s407 = sor.u32 256, 8
        %408 = vbcast.lane.b32.xlu0 %v402, %s407
        %v409 = vpop.permute.xlu0 %408
        %v410 = vlaneseq
        %v411 = vshrl.u32 %v410, 7
        %v412 = vsub.s32 2, %v411
        %v413 = vrot.slane %v288, %v412
        %415 = vbcast.lane.b32.xlu0 %v413, 256
        %v416 = vpop.permute.xlu0 %415
        %s418 = sor.u32 256, 8
        %419 = vbcast.lane.b32.xlu0 %v413, %s418
        %v420 = vpop.permute.xlu0 %419
        %v421 = vlaneseq
        %v422 = vshrl.u32 %v421, 7
        %v423 = vsub.s32 3, %v422
        %v424 = vrot.slane %v288, %v423
        %426 = vbcast.lane.b32.xlu0 %v424, 256
        %v427 = vpop.permute.xlu0 %426
        %s429 = sor.u32 256, 8
        %430 = vbcast.lane.b32.xlu0 %v424, %s429
        %v431 = vpop.permute.xlu0 %430
        %v432 = vlaneseq
        %v433 = vshrl.u32 %v432, 7
        %v434 = vsub.s32 4, %v433
        %v435 = vrot.slane %v288, %v434
        %437 = vbcast.lane.b32.xlu0 %v435, 256
        %v438 = vpop.permute.xlu0 %437
        %s440 = sor.u32 256, 8
        %441 = vbcast.lane.b32.xlu0 %v435, %s440
        %v442 = vpop.permute.xlu0 %441
        %v443 = vlaneseq
        %v444 = vshrl.u32 %v443, 7
        %v445 = vsub.s32 5, %v444
        %v446 = vrot.slane %v288, %v445
        %448 = vbcast.lane.b32.xlu0 %v446, 256
        %v449 = vpop.permute.xlu0 %448
        %s451 = sor.u32 256, 8
        %452 = vbcast.lane.b32.xlu0 %v446, %s451
        %v453 = vpop.permute.xlu0 %452
        %v454 = vlaneseq
        %v455 = vshrl.u32 %v454, 7
        %v456 = vsub.s32 6, %v455
        %v457 = vrot.slane %v288, %v456
        %459 = vbcast.lane.b32.xlu0 %v457, 256
        %v460 = vpop.permute.xlu0 %459
        %s462 = sor.u32 256, 8
        %463 = vbcast.lane.b32.xlu0 %v457, %s462
        %v464 = vpop.permute.xlu0 %463
        %v465 = vlaneseq
        %v466 = vshrl.u32 %v465, 7
        %v467 = vsub.s32 7, %v466
        %v468 = vrot.slane %v288, %v467
        %470 = vbcast.lane.b32.xlu0 %v468, 256
        %v471 = vpop.permute.xlu0 %470
        %s473 = sor.u32 256, 8
        %474 = vbcast.lane.b32.xlu0 %v468, %s473
        %v475 = vpop.permute.xlu0 %474
        %v476 = vlaneseq
        %v477 = vshrl.u32 %v476, 7
        %v478 = vsub.s32 0, %v477
        %v479 = vrot.slane %v291, %v478
        %481 = vbcast.lane.b32.xlu0 %v479, 256
        %v482 = vpop.permute.xlu0 %481
        %s484 = sor.u32 256, 8
        %485 = vbcast.lane.b32.xlu0 %v479, %s484
        %v486 = vpop.permute.xlu0 %485
        %v487 = vlaneseq
        %v488 = vshrl.u32 %v487, 7
        %v489 = vsub.s32 1, %v488
        %v490 = vrot.slane %v291, %v489
        %492 = vbcast.lane.b32.xlu0 %v490, 256
        %v493 = vpop.permute.xlu0 %492
        %s495 = sor.u32 256, 8
        %496 = vbcast.lane.b32.xlu0 %v490, %s495
        %v497 = vpop.permute.xlu0 %496
        %v498 = vlaneseq
        %v499 = vshrl.u32 %v498, 7
        %v500 = vsub.s32 2, %v499
        %v501 = vrot.slane %v291, %v500
        %503 = vbcast.lane.b32.xlu0 %v501, 256
        %v504 = vpop.permute.xlu0 %503
        %s506 = sor.u32 256, 8
        %507 = vbcast.lane.b32.xlu0 %v501, %s506
        %v508 = vpop.permute.xlu0 %507
        %v509 = vlaneseq
        %v510 = vshrl.u32 %v509, 7
        %v511 = vsub.s32 3, %v510
        %v512 = vrot.slane %v291, %v511
        %514 = vbcast.lane.b32.xlu0 %v512, 256
        %v515 = vpop.permute.xlu0 %514
        %s517 = sor.u32 256, 8
        %518 = vbcast.lane.b32.xlu0 %v512, %s517
        %v519 = vpop.permute.xlu0 %518
        %v520 = vlaneseq
        %v521 = vshrl.u32 %v520, 7
        %v522 = vsub.s32 4, %v521
        %v523 = vrot.slane %v291, %v522
        %525 = vbcast.lane.b32.xlu0 %v523, 256
        %v526 = vpop.permute.xlu0 %525
        %s528 = sor.u32 256, 8
        %529 = vbcast.lane.b32.xlu0 %v523, %s528
        %v530 = vpop.permute.xlu0 %529
        %v531 = vlaneseq
        %v532 = vshrl.u32 %v531, 7
        %v533 = vsub.s32 5, %v532
        %v534 = vrot.slane %v291, %v533
        %536 = vbcast.lane.b32.xlu0 %v534, 256
        %v537 = vpop.permute.xlu0 %536
        %s539 = sor.u32 256, 8
        %540 = vbcast.lane.b32.xlu0 %v534, %s539
        %v541 = vpop.permute.xlu0 %540
        %v542 = vlaneseq
        %v543 = vshrl.u32 %v542, 7
        %v544 = vsub.s32 6, %v543
        %v545 = vrot.slane %v291, %v544
        %547 = vbcast.lane.b32.xlu0 %v545, 256
        %v548 = vpop.permute.xlu0 %547
        %s550 = sor.u32 256, 8
        %551 = vbcast.lane.b32.xlu0 %v545, %s550
        %v552 = vpop.permute.xlu0 %551
        %v553 = vlaneseq
        %v554 = vshrl.u32 %v553, 7
        %v555 = vsub.s32 7, %v554
        %v556 = vrot.slane %v291, %v555
        %558 = vbcast.lane.b32.xlu0 %v556, 256
        %v559 = vpop.permute.xlu0 %558
        %s561 = sor.u32 256, 8
        %562 = vbcast.lane.b32.xlu0 %v556, %s561
        %v563 = vpop.permute.xlu0 %562
        %v564 = vlaneseq
        %v565 = vshrl.u32 %v564, 7
        %v566 = vsub.s32 0, %v565
        %v567 = vrot.slane %v285, %v566
        %569 = vbcast.lane.b32.xlu0 %v567, 256
        %v570 = vpop.permute.xlu0 %569
        %s572 = sor.u32 256, 8
        %573 = vbcast.lane.b32.xlu0 %v567, %s572
        %v574 = vpop.permute.xlu0 %573
        %v575 = vlaneseq
        %v576 = vshrl.u32 %v575, 7
        %v577 = vsub.s32 1, %v576
        %v578 = vrot.slane %v285, %v577
        %580 = vbcast.lane.b32.xlu0 %v578, 256
        %v581 = vpop.permute.xlu0 %580
        %s583 = sor.u32 256, 8
        %584 = vbcast.lane.b32.xlu0 %v578, %s583
        %v585 = vpop.permute.xlu0 %584
        %v586 = vlaneseq
        %v587 = vshrl.u32 %v586, 7
        %v588 = vsub.s32 2, %v587
        %v589 = vrot.slane %v285, %v588
        %591 = vbcast.lane.b32.xlu0 %v589, 256
        %v592 = vpop.permute.xlu0 %591
        %s594 = sor.u32 256, 8
        %595 = vbcast.lane.b32.xlu0 %v589, %s594
        %v596 = vpop.permute.xlu0 %595
        %v597 = vlaneseq
        %v598 = vshrl.u32 %v597, 7
        %v599 = vsub.s32 3, %v598
        %v600 = vrot.slane %v285, %v599
        %602 = vbcast.lane.b32.xlu0 %v600, 256
        %v603 = vpop.permute.xlu0 %602
        %s605 = sor.u32 256, 8
        %606 = vbcast.lane.b32.xlu0 %v600, %s605
        %v607 = vpop.permute.xlu0 %606
        %v608 = vlaneseq
        %v609 = vshrl.u32 %v608, 7
        %v610 = vsub.s32 4, %v609
        %v611 = vrot.slane %v285, %v610
        %613 = vbcast.lane.b32.xlu0 %v611, 256
        %v614 = vpop.permute.xlu0 %613
        %s616 = sor.u32 256, 8
        %617 = vbcast.lane.b32.xlu0 %v611, %s616
        %v618 = vpop.permute.xlu0 %617
        %v619 = vlaneseq
        %v620 = vshrl.u32 %v619, 7
        %v621 = vsub.s32 5, %v620
        %v622 = vrot.slane %v285, %v621
        %624 = vbcast.lane.b32.xlu0 %v622, 256
        %v625 = vpop.permute.xlu0 %624
        %s627 = sor.u32 256, 8
        %628 = vbcast.lane.b32.xlu0 %v622, %s627
        %v629 = vpop.permute.xlu0 %628
        %v630 = vlaneseq
        %v631 = vshrl.u32 %v630, 7
        %v632 = vsub.s32 6, %v631
        %v633 = vrot.slane %v285, %v632
        %635 = vbcast.lane.b32.xlu0 %v633, 256
        %v636 = vpop.permute.xlu0 %635
        %s638 = sor.u32 256, 8
        %639 = vbcast.lane.b32.xlu0 %v633, %s638
        %v640 = vpop.permute.xlu0 %639
        %v641 = vlaneseq
        %v642 = vshrl.u32 %v641, 7
        %v643 = vsub.s32 7, %v642
        %v644 = vrot.slane %v285, %v643
        %646 = vbcast.lane.b32.xlu0 %v644, 256
        %v647 = vpop.permute.xlu0 %646
        %s649 = sor.u32 256, 8
        %650 = vbcast.lane.b32.xlu0 %v644, %s649
        %v651 = vpop.permute.xlu0 %650
        %v652 = vlaneseq
        %v653 = vshrl.u32 %v652, 7
        %v654 = vsub.s32 0, %v653
        %v655 = vrot.slane %v282, %v654
        %657 = vbcast.lane.b32.xlu0 %v655, 256
        %v658 = vpop.permute.xlu0 %657
        %s660 = sor.u32 256, 8
        %661 = vbcast.lane.b32.xlu0 %v655, %s660
        %v662 = vpop.permute.xlu0 %661
        %v663 = vlaneseq
        %v664 = vshrl.u32 %v663, 7
        %v665 = vsub.s32 1, %v664
        %v666 = vrot.slane %v282, %v665
        %668 = vbcast.lane.b32.xlu0 %v666, 256
        %v669 = vpop.permute.xlu0 %668
        %s671 = sor.u32 256, 8
        %672 = vbcast.lane.b32.xlu0 %v666, %s671
        %v673 = vpop.permute.xlu0 %672
        %v674 = vlaneseq
        %v675 = vshrl.u32 %v674, 7
        %v676 = vsub.s32 2, %v675
        %v677 = vrot.slane %v282, %v676
        %679 = vbcast.lane.b32.xlu0 %v677, 256
        %v680 = vpop.permute.xlu0 %679
        %s682 = sor.u32 256, 8
        %683 = vbcast.lane.b32.xlu0 %v677, %s682
        %v684 = vpop.permute.xlu0 %683
        %v685 = vlaneseq
        %v686 = vshrl.u32 %v685, 7
        %v687 = vsub.s32 3, %v686
        %v688 = vrot.slane %v282, %v687
        %690 = vbcast.lane.b32.xlu0 %v688, 256
        %v691 = vpop.permute.xlu0 %690
        %s693 = sor.u32 256, 8
        %694 = vbcast.lane.b32.xlu0 %v688, %s693
        %v695 = vpop.permute.xlu0 %694
        %v696 = vlaneseq
        %v697 = vshrl.u32 %v696, 7
        %v698 = vsub.s32 4, %v697
        %v699 = vrot.slane %v282, %v698
        %701 = vbcast.lane.b32.xlu0 %v699, 256
        %v702 = vpop.permute.xlu0 %701
        %s704 = sor.u32 256, 8
        %705 = vbcast.lane.b32.xlu0 %v699, %s704
        %v706 = vpop.permute.xlu0 %705
        %v707 = vlaneseq
        %v708 = vshrl.u32 %v707, 7
        %v709 = vsub.s32 5, %v708
        %v710 = vrot.slane %v282, %v709
        %712 = vbcast.lane.b32.xlu0 %v710, 256
        %v713 = vpop.permute.xlu0 %712
        %s715 = sor.u32 256, 8
        %716 = vbcast.lane.b32.xlu0 %v710, %s715
        %v717 = vpop.permute.xlu0 %716
        %v718 = vlaneseq
        %v719 = vshrl.u32 %v718, 7
        %v720 = vsub.s32 6, %v719
        %v721 = vrot.slane %v282, %v720
        %723 = vbcast.lane.b32.xlu0 %v721, 256
        %v724 = vpop.permute.xlu0 %723
        %s726 = sor.u32 256, 8
        %727 = vbcast.lane.b32.xlu0 %v721, %s726
        %v728 = vpop.permute.xlu0 %727
        %v729 = vlaneseq
        %v730 = vshrl.u32 %v729, 7
        %v731 = vsub.s32 7, %v730
        %v732 = vrot.slane %v282, %v731
        %734 = vbcast.lane.b32.xlu0 %v732, 256
        %v735 = vpop.permute.xlu0 %734
        %s737 = sor.u32 256, 8
        %738 = vbcast.lane.b32.xlu0 %v732, %s737
        %v739 = vpop.permute.xlu0 %738
        %v740 = vlaneseq
        %v741 = vshrl.u32 %v740, 7
        %v742 = vsub.s32 0, %v741
        %v743 = vrot.slane %v295, %v742
        %745 = vbcast.lane.b32.xlu0 %v743, 256
        %v746 = vpop.permute.xlu0 %745
        %s748 = sor.u32 256, 8
        %749 = vbcast.lane.b32.xlu0 %v743, %s748
        %v750 = vpop.permute.xlu0 %749
        %v751 = vlaneseq
        %v752 = vshrl.u32 %v751, 7
        %v753 = vsub.s32 1, %v752
        %v754 = vrot.slane %v295, %v753
        %756 = vbcast.lane.b32.xlu0 %v754, 256
        %v757 = vpop.permute.xlu0 %756
        %s759 = sor.u32 256, 8
        %760 = vbcast.lane.b32.xlu0 %v754, %s759
        %v761 = vpop.permute.xlu0 %760
        %v762 = vlaneseq
        %v763 = vshrl.u32 %v762, 7
        %v764 = vsub.s32 2, %v763
        %v765 = vrot.slane %v295, %v764
        %767 = vbcast.lane.b32.xlu0 %v765, 256
        %v768 = vpop.permute.xlu0 %767
        %s770 = sor.u32 256, 8
        %771 = vbcast.lane.b32.xlu0 %v765, %s770
        %v772 = vpop.permute.xlu0 %771
        %v773 = vlaneseq
        %v774 = vshrl.u32 %v773, 7
        %v775 = vsub.s32 3, %v774
        %v776 = vrot.slane %v295, %v775
        %778 = vbcast.lane.b32.xlu0 %v776, 256
        %v779 = vpop.permute.xlu0 %778
        %s781 = sor.u32 256, 8
        %782 = vbcast.lane.b32.xlu0 %v776, %s781
        %v783 = vpop.permute.xlu0 %782
        %v784 = vlaneseq
        %v785 = vshrl.u32 %v784, 7
        %v786 = vsub.s32 4, %v785
        %v787 = vrot.slane %v295, %v786
        %789 = vbcast.lane.b32.xlu0 %v787, 256
        %v790 = vpop.permute.xlu0 %789
        %s792 = sor.u32 256, 8
        %793 = vbcast.lane.b32.xlu0 %v787, %s792
        %v794 = vpop.permute.xlu0 %793
        %v795 = vlaneseq
        %v796 = vshrl.u32 %v795, 7
        %v797 = vsub.s32 5, %v796
        %v798 = vrot.slane %v295, %v797
        %800 = vbcast.lane.b32.xlu0 %v798, 256
        %v801 = vpop.permute.xlu0 %800
        %s803 = sor.u32 256, 8
        %804 = vbcast.lane.b32.xlu0 %v798, %s803
        %v805 = vpop.permute.xlu0 %804
        %v806 = vlaneseq
        %v807 = vshrl.u32 %v806, 7
        %v808 = vsub.s32 6, %v807
        %v809 = vrot.slane %v295, %v808
        %811 = vbcast.lane.b32.xlu0 %v809, 256
        %v812 = vpop.permute.xlu0 %811
        %s814 = sor.u32 256, 8
        %815 = vbcast.lane.b32.xlu0 %v809, %s814
        %v816 = vpop.permute.xlu0 %815
        %v817 = vlaneseq
        %v818 = vshrl.u32 %v817, 7
        %v819 = vsub.s32 7, %v818
        %v820 = vrot.slane %v295, %v819
        %822 = vbcast.lane.b32.xlu0 %v820, 256
        %v823 = vpop.permute.xlu0 %822
        %s825 = sor.u32 256, 8
        %826 = vbcast.lane.b32.xlu0 %v820, %s825
        %v827 = vpop.permute.xlu0 %826
        %v828 = vlaneseq
        %v829 = vshrl.u32 %v828, 7
        %v830 = vsub.s32 0, %v829
        %v831 = vrot.slane %v299, %v830
        %833 = vbcast.lane.b32.xlu0 %v831, 256
        %v834 = vpop.permute.xlu0 %833
        %s836 = sor.u32 256, 8
        %837 = vbcast.lane.b32.xlu0 %v831, %s836
        %v838 = vpop.permute.xlu0 %837
        %v839 = vlaneseq
        %v840 = vshrl.u32 %v839, 7
        %v841 = vsub.s32 1, %v840
        %v842 = vrot.slane %v299, %v841
        %844 = vbcast.lane.b32.xlu0 %v842, 256
        %v845 = vpop.permute.xlu0 %844
        %s847 = sor.u32 256, 8
        %848 = vbcast.lane.b32.xlu0 %v842, %s847
        %v849 = vpop.permute.xlu0 %848
        %v850 = vlaneseq
        %v851 = vshrl.u32 %v850, 7
        %v852 = vsub.s32 2, %v851
        %v853 = vrot.slane %v299, %v852
        %855 = vbcast.lane.b32.xlu0 %v853, 256
        %v856 = vpop.permute.xlu0 %855
        %s858 = sor.u32 256, 8
        %859 = vbcast.lane.b32.xlu0 %v853, %s858
        %v860 = vpop.permute.xlu0 %859
        %v861 = vlaneseq
        %v862 = vshrl.u32 %v861, 7
        %v863 = vsub.s32 3, %v862
        %v864 = vrot.slane %v299, %v863
        %866 = vbcast.lane.b32.xlu0 %v864, 256
        %v867 = vpop.permute.xlu0 %866
        %s869 = sor.u32 256, 8
        %870 = vbcast.lane.b32.xlu0 %v864, %s869
        %v871 = vpop.permute.xlu0 %870
        %v872 = vlaneseq
        %v873 = vshrl.u32 %v872, 7
        %v874 = vsub.s32 4, %v873
        %v875 = vrot.slane %v299, %v874
        %877 = vbcast.lane.b32.xlu0 %v875, 256
        %v878 = vpop.permute.xlu0 %877
        %s880 = sor.u32 256, 8
        %881 = vbcast.lane.b32.xlu0 %v875, %s880
        %v882 = vpop.permute.xlu0 %881
        %v883 = vlaneseq
        %v884 = vshrl.u32 %v883, 7
        %v885 = vsub.s32 5, %v884
        %v886 = vrot.slane %v299, %v885
        %888 = vbcast.lane.b32.xlu0 %v886, 256
        %v889 = vpop.permute.xlu0 %888
        %s891 = sor.u32 256, 8
        %892 = vbcast.lane.b32.xlu0 %v886, %s891
        %v893 = vpop.permute.xlu0 %892
        %v894 = vlaneseq
        %v895 = vshrl.u32 %v894, 7
        %v896 = vsub.s32 6, %v895
        %v897 = vrot.slane %v299, %v896
        %899 = vbcast.lane.b32.xlu0 %v897, 256
        %v900 = vpop.permute.xlu0 %899
        %s902 = sor.u32 256, 8
        %903 = vbcast.lane.b32.xlu0 %v897, %s902
        %v904 = vpop.permute.xlu0 %903
        %v905 = vlaneseq
        %v906 = vshrl.u32 %v905, 7
        %v907 = vsub.s32 7, %v906
        %v908 = vrot.slane %v299, %v907
        %910 = vbcast.lane.b32.xlu0 %v908, 256
        %v911 = vpop.permute.xlu0 %910
        %s913 = sor.u32 256, 8
        %914 = vbcast.lane.b32.xlu0 %v908, %s913
        %v915 = vpop.permute.xlu0 %914
        %vm916 = vcmask 7168
        %v917 = vsel %vm916, %v306, %v394
        %v918 = vsel %vm916, %v310, %v398
        %v919 = vsel %vm916, %v317, %v405
        %v920 = vsel %vm916, %v321, %v409
        %v921 = vsel %vm916, %v328, %v416
        %v922 = vsel %vm916, %v332, %v420
        %v923 = vsel %vm916, %v339, %v427
        %v924 = vsel %vm916, %v343, %v431
        %v925 = vsel %vm916, %v350, %v438
        %v926 = vsel %vm916, %v354, %v442
        %v927 = vsel %vm916, %v361, %v449
        %v928 = vsel %vm916, %v365, %v453
        %v929 = vsel %vm916, %v372, %v460
        %v930 = vsel %vm916, %v376, %v464
        %v931 = vsel %vm916, %v383, %v471
        %v932 = vsel %vm916, %v387, %v475
        %vm933 = vcmask 15360
        %v934 = vsel %vm933, %v917, %v482
        %v935 = vsel %vm933, %v918, %v486
        %v936 = vsel %vm933, %v919, %v493
        %v937 = vsel %vm933, %v920, %v497
        %v938 = vsel %vm933, %v921, %v504
        %v939 = vsel %vm933, %v922, %v508
        %v940 = vsel %vm933, %v923, %v515
        %v941 = vsel %vm933, %v924, %v519
        %v942 = vsel %vm933, %v925, %v526
        %v943 = vsel %vm933, %v926, %v530
        %v944 = vsel %vm933, %v927, %v537
        %v945 = vsel %vm933, %v928, %v541
        %v946 = vsel %vm933, %v929, %v548
        %v947 = vsel %vm933, %v930, %v552
        %v948 = vsel %vm933, %v931, %v559
        %v949 = vsel %vm933, %v932, %v563
        %vm950 = vcmask 23552
        %v951 = vsel %vm950, %v934, %v570
        %v952 = vsel %vm950, %v935, %v574
        %v953 = vsel %vm950, %v936, %v581
        %v954 = vsel %vm950, %v937, %v585
        %v955 = vsel %vm950, %v938, %v592
        %v956 = vsel %vm950, %v939, %v596
        %v957 = vsel %vm950, %v940, %v603
        %v958 = vsel %vm950, %v941, %v607
        %v959 = vsel %vm950, %v942, %v614
        %v960 = vsel %vm950, %v943, %v618
        %v961 = vsel %vm950, %v944, %v625
        %v962 = vsel %vm950, %v945, %v629
        %v963 = vsel %vm950, %v946, %v636
        %v964 = vsel %vm950, %v947, %v640
        %v965 = vsel %vm950, %v948, %v647
        %v966 = vsel %vm950, %v949, %v651
        %vm967 = vcmask 31744
        %v968 = vsel %vm967, %v951, %v658
        %v969 = vsel %vm967, %v952, %v662
        %v970 = vsel %vm967, %v953, %v669
        %v971 = vsel %vm967, %v954, %v673
        %v972 = vsel %vm967, %v955, %v680
        %v973 = vsel %vm967, %v956, %v684
        %v974 = vsel %vm967, %v957, %v691
        %v975 = vsel %vm967, %v958, %v695
        %v976 = vsel %vm967, %v959, %v702
        %v977 = vsel %vm967, %v960, %v706
        %v978 = vsel %vm967, %v961, %v713
        %v979 = vsel %vm967, %v962, %v717
        %v980 = vsel %vm967, %v963, %v724
        %v981 = vsel %vm967, %v964, %v728
        %v982 = vsel %vm967, %v965, %v735
        %v983 = vsel %vm967, %v966, %v739
        %vm984 = vcmask 39936
        %v985 = vsel %vm984, %v968, %v746
        %v986 = vsel %vm984, %v969, %v750
        %v987 = vsel %vm984, %v970, %v757
        %v988 = vsel %vm984, %v971, %v761
        %v989 = vsel %vm984, %v972, %v768
        %v990 = vsel %vm984, %v973, %v772
        %v991 = vsel %vm984, %v974, %v779
        %v992 = vsel %vm984, %v975, %v783
        %v993 = vsel %vm984, %v976, %v790
        %v994 = vsel %vm984, %v977, %v794
        %v995 = vsel %vm984, %v978, %v801
        %v996 = vsel %vm984, %v979, %v805
        %v997 = vsel %vm984, %v980, %v812
        %v998 = vsel %vm984, %v981, %v816
        %v999 = vsel %vm984, %v982, %v823
        %v1000 = vsel %vm984, %v983, %v827
        %vm1001 = vcmask 48128
        %v1002 = vsel %vm1001, %v985, %v834
        %v1003 = vsel %vm1001, %v986, %v838
        %v1004 = vsel %vm1001, %v987, %v845
        %v1005 = vsel %vm1001, %v988, %v849
        %v1006 = vsel %vm1001, %v989, %v856
        %v1007 = vsel %vm1001, %v990, %v860
        %v1008 = vsel %vm1001, %v991, %v867
        %v1009 = vsel %vm1001, %v992, %v871
        %v1010 = vsel %vm1001, %v993, %v878
        %v1011 = vsel %vm1001, %v994, %v882
        %v1012 = vsel %vm1001, %v995, %v889
        %v1013 = vsel %vm1001, %v996, %v893
        %v1014 = vsel %vm1001, %v997, %v900
        %v1015 = vsel %vm1001, %v998, %v904
        %v1016 = vsel %vm1001, %v999, %v911
        %v1017 = vsel %vm1001, %v1000, %v915
        %vm1018 = vcmask 56320
        %v1019 = vsel %vm1018, %v1002, 0.0
        %v1020 = vsel %vm1018, %v1003, 0.0
        %v1021 = vsel %vm1018, %v1004, 0.0
        %v1022 = vsel %vm1018, %v1005, 0.0
        %v1023 = vsel %vm1018, %v1006, 0.0
        %v1024 = vsel %vm1018, %v1007, 0.0
        %v1025 = vsel %vm1018, %v1008, 0.0
        %v1026 = vsel %vm1018, %v1009, 0.0
        %v1027 = vsel %vm1018, %v1010, 0.0
        %v1028 = vsel %vm1018, %v1011, 0.0
        %v1029 = vsel %vm1018, %v1012, 0.0
        %v1030 = vsel %vm1018, %v1013, 0.0
        %v1031 = vsel %vm1018, %v1014, 0.0
        %v1032 = vsel %vm1018, %v1015, 0.0
        %v1033 = vsel %vm1018, %v1016, 0.0
        %v1034 = vsel %vm1018, %v1017, 0.0
        %v1035 = vld [vmem:[%s3] sm:$0xff]
        %vm1036 = vcmask 64512
        %v1038 = vsel %vm1036, %v1019, 0
        %v1041 = vsel %vm1036, %v1020, 0
        %v1044 = vsel %vm1036, %v1021, 0
        %v1047 = vsel %vm1036, %v1022, 0
        %v1050 = vsel %vm1036, %v1023, 0
        %v1053 = vsel %vm1036, %v1024, 0
        %v1056 = vsel %vm1036, %v1025, 0
        %v1059 = vsel %vm1036, %v1026, 0
        %v1062 = vsel %vm1036, %v1027, 0
        %v1065 = vsel %vm1036, %v1028, 0
        %v1068 = vsel %vm1036, %v1029, 0
        %v1071 = vsel %vm1036, %v1030, 0
        %v1074 = vsel %vm1036, %v1031, 0
        %v1077 = vsel %vm1036, %v1032, 0
        %v1080 = vsel %vm1036, %v1033, 0
        %v1083 = vsel %vm1036, %v1034, 0
        %1085 = vmatprep.subr.mxu0 0.0
        %1086 = vmatpush1.msra.mxu0 %v1035
        %1087 = vmatprep.subr.mxu0 0.0
        %1088 = vmatpush1.msra.mxu0 0.0
        %1089 = vmatprep.subr.mxu0 0.0
        %1090 = vmatpush1.msra.mxu0 0.0
        %1091 = vmatprep.subr.mxu0 0.0
        %1092 = vmatpush1.msra.mxu0 0.0
        %1093 = vmatprep.subr.mxu0 0.0
        %1094 = vmatpush1.msra.mxu0 0.0
        %1095 = vmatprep.subr.mxu0 0.0
        %1096 = vmatpush1.msra.mxu0 0.0
        %1097 = vmatprep.subr.mxu0 0.0
        %1098 = vmatpush1.msra.mxu0 0.0
        %1099 = vmatprep.subr.mxu0 0.0
        %1100 = vmatpush1.msra.mxu0 0.0
        %1101 = vmatprep.subr.mxu0 0.0
        %1102 = vmatpush1.msra.mxu0 0.0
        %1103 = vmatprep.subr.mxu0 0.0
        %1104 = vmatpush1.msra.mxu0 0.0
        %1105 = vmatprep.subr.mxu0 0.0
        %1106 = vmatpush1.msra.mxu0 0.0
        %1107 = vmatprep.subr.mxu0 0.0
        %1108 = vmatpush1.msra.mxu0 0.0
        %1109 = vmatprep.subr.mxu0 0.0
        %1110 = vmatpush1.msra.mxu0 0.0
        %1111 = vmatprep.subr.mxu0 0.0
        %1112 = vmatpush1.msra.mxu0 0.0
        %1113 = vmatprep.subr.mxu0 0.0
        %1114 = vmatpush1.msra.mxu0 0.0
        %1115 = vmatprep.subr.mxu0 0.0
        %1116 = vmatpush1.msra.mxu0 0.0
        %1117 = vmatprep.subr.mxu0 0.0
        %1118 = vmatpush1.msra.mxu0 0.0
        %1119 = vmatprep.subr.mxu0 0.0
        %1120 = vmatpush1.msra.mxu0 0.0
        %1121 = vmatprep.subr.mxu0 0.0
        %1122 = vmatpush1.msra.mxu0 0.0
        %1123 = vmatprep.subr.mxu0 0.0
        %1124 = vmatpush1.msra.mxu0 0.0
        %1125 = vmatprep.subr.mxu0 0.0
        %1126 = vmatpush1.msra.mxu0 0.0
        %1127 = vmatprep.subr.mxu0 0.0
        %1128 = vmatpush1.msra.mxu0 0.0
        %1129 = vmatprep.subr.mxu0 0.0
        %1130 = vmatpush1.msra.mxu0 0.0
        %1131 = vmatprep.subr.mxu0 0.0
        %1132 = vmatpush1.msra.mxu0 0.0
        %1133 = vmatprep.subr.mxu0 0.0
        %1134 = vmatpush1.msra.mxu0 0.0
        %1135 = vmatprep.subr.mxu0 0.0
        %1136 = vmatpush1.msra.mxu0 0.0
        %1137 = vmatprep.subr.mxu0 0.0
        %1138 = vmatpush1.msra.mxu0 0.0
        %1139 = vmatprep.subr.mxu0 0.0
        %1140 = vmatpush1.msra.mxu0 0.0
        %1141 = vmatprep.subr.mxu0 0.0
        %1142 = vmatpush1.msra.mxu0 0.0
        %1143 = vmatprep.subr.mxu0 0.0
        %1144 = vmatpush1.msra.mxu0 0.0
        %1145 = vmatprep.subr.mxu0 0.0
        %1146 = vmatpush1.msra.mxu0 0.0
        %1147 = vmatprep.subr.mxu0 0.0
        %1148 = vmatpush1.msra.mxu0 0.0
        %1149 = vmatprep.mubr.f32.mxu0 0.0
        %1150 = vmatmul.mubr.f32.gmra.mrb[0].mxu0 %v1038
        %v1151 = vpop.f32.mrb[0].mxu0
        %v1152 = vadd.f32 0.0, %v1151
        %v1153 = vpop.f32.mrb[0].mxu0
        %1154 = vmatprep.mubr.f32.mxu0 0.0
        %1155 = vmatmul.mubr.f32.gmra.mrb[0].mxu0 %v1041
        %v1156 = vpop.f32.mrb[0].mxu0
        %v1157 = vadd.f32 0.0, %v1156
        %v1158 = vpop.f32.mrb[0].mxu0
        %1159 = vmatprep.mubr.f32.mxu0 0.0
        %1160 = vmatmul.mubr.f32.gmra.mrb[0].mxu0 %v1044
        %v1161 = vpop.f32.mrb[0].mxu0
        %v1162 = vadd.f32 0.0, %v1161
        %v1163 = vpop.f32.mrb[0].mxu0
        %1164 = vmatprep.mubr.f32.mxu0 0.0
        %1165 = vmatmul.mubr.f32.gmra.mrb[0].mxu0 %v1047
        %v1166 = vpop.f32.mrb[0].mxu0
        %v1167 = vadd.f32 0.0, %v1166
        %v1168 = vpop.f32.mrb[0].mxu0
        %1169 = vmatprep.mubr.f32.mxu0 0.0
        %1170 = vmatmul.mubr.f32.gmra.mrb[0].mxu0 %v1050
        %v1171 = vpop.f32.mrb[0].mxu0
        %v1172 = vadd.f32 0.0, %v1171
        %v1173 = vpop.f32.mrb[0].mxu0
        %1174 = vmatprep.mubr.f32.mxu0 0.0
        %1175 = vmatmul.mubr.f32.gmra.mrb[0].mxu0 %v1053
        %v1176 = vpop.f32.mrb[0].mxu0
        %v1177 = vadd.f32 0.0, %v1176
        %v1178 = vpop.f32.mrb[0].mxu0
        %1179 = vmatprep.mubr.f32.mxu0 0.0
        %1180 = vmatmul.mubr.f32.gmra.mrb[0].mxu0 %v1056
        %v1181 = vpop.f32.mrb[0].mxu0
        %v1182 = vadd.f32 0.0, %v1181
        %v1183 = vpop.f32.mrb[0].mxu0
        %1184 = vmatprep.mubr.f32.mxu0 0.0
        %1185 = vmatmul.mubr.f32.gmra.mrb[0].mxu0 %v1059
        %v1186 = vpop.f32.mrb[0].mxu0
        %v1187 = vadd.f32 0.0, %v1186
        %v1188 = vpop.f32.mrb[0].mxu0
        %1189 = vmatprep.mubr.f32.mxu0 0.0
        %1190 = vmatmul.mubr.f32.gmra.mrb[0].mxu0 %v1062
        %v1191 = vpop.f32.mrb[0].mxu0
        %v1192 = vadd.f32 0.0, %v1191
        %v1193 = vpop.f32.mrb[0].mxu0
        %1194 = vmatprep.mubr.f32.mxu0 0.0
        %1195 = vmatmul.mubr.f32.gmra.mrb[0].mxu0 %v1065
        %v1196 = vpop.f32.mrb[0].mxu0
        %v1197 = vadd.f32 0.0, %v1196
        %v1198 = vpop.f32.mrb[0].mxu0
        %1199 = vmatprep.mubr.f32.mxu0 0.0
        %1200 = vmatmul.mubr.f32.gmra.mrb[0].mxu0 %v1068
        %v1201 = vpop.f32.mrb[0].mxu0
        %v1202 = vadd.f32 0.0, %v1201
        %v1203 = vpop.f32.mrb[0].mxu0
        %1204 = vmatprep.mubr.f32.mxu0 0.0
        %1205 = vmatmul.mubr.f32.gmra.mrb[0].mxu0 %v1071
        %v1206 = vpop.f32.mrb[0].mxu0
        %v1207 = vadd.f32 0.0, %v1206
        %v1208 = vpop.f32.mrb[0].mxu0
        %1209 = vmatprep.mubr.f32.mxu0 0.0
        %1210 = vmatmul.mubr.f32.gmra.mrb[0].mxu0 %v1074
        %v1211 = vpop.f32.mrb[0].mxu0
        %v1212 = vadd.f32 0.0, %v1211
        %v1213 = vpop.f32.mrb[0].mxu0
        %1214 = vmatprep.mubr.f32.mxu0 0.0
        %1215 = vmatmul.mubr.f32.gmra.mrb[0].mxu0 %v1077
        %v1216 = vpop.f32.mrb[0].mxu0
        %v1217 = vadd.f32 0.0, %v1216
        %v1218 = vpop.f32.mrb[0].mxu0
        %1219 = vmatprep.mubr.f32.mxu0 0.0
        %1220 = vmatmul.mubr.f32.gmra.mrb[0].mxu0 %v1080
        %v1221 = vpop.f32.mrb[0].mxu0
        %v1222 = vadd.f32 0.0, %v1221
        %v1223 = vpop.f32.mrb[0].mxu0
        %1224 = vmatprep.mubr.f32.mxu0 0.0
        %1225 = vmatmul.mubr.f32.gmra.mrb[0].mxu0 %v1083
        %v1226 = vpop.f32.mrb[0].mxu0
        %v1227 = vadd.f32 0.0, %v1226
        %v1228 = vpop.f32.mrb[0].mxu0
        %1229 = vdwg.mxu0
        %s1230 = smul.u32 %s29, 8
        %s1231 = sld [smem:[#allocation3 + %s1230]]
        %s1232 = smul.u32 %s1231, 4
        %s1233 = scalar_lea.vmem [#allocation9], %s1232
        %v1234 = vld [vmem:[%s1233] sm:$0xf]
        %v1236 = vrot.slane %v1234, 4
        %vm1238 = vcmask 1043456
        %v1239 = vsel %vm1238, %v1234, %v1236
        %v1240 = vadd.f32 %v1152, %v1239
        %v1241 = vadd.f32 %v1157, %v1239
        %v1242 = vpack.c.bf16 %v1241, %v1240
        %v1244 = vunpack.c.l.b16 %v1242
        %v1245 = vunpack.c.h.b16 %v1242
        %v1246 = vpack.c.b16 %v1244, %v1244
        %v1247 = vpack.c.b16 %v1245, %v1245
        %1250 = vst [vmem:[%s268] sm:$0xf] %v1246
        %1251 = vst [vmem:[%s268 + $0x4] sm:$0xf] %v1247
        %s1252 = sadd.s32 %s1230, 1
        %s1253 = sld [smem:[#allocation3 + %s1252]]
        %s1254 = smul.u32 %s1253, 4
        %s1255 = scalar_lea.vmem [#allocation9], %s1254
        %v1256 = vld [vmem:[%s1255] sm:$0xf]
        %v1258 = vrot.slane %v1256, 4
        %v1260 = vsel %vm1238, %v1256, %v1258
        %v1261 = vadd.f32 %v1162, %v1260
        %v1262 = vadd.f32 %v1167, %v1260
        %v1263 = vpack.c.bf16 %v1262, %v1261
        %v1265 = vunpack.c.l.b16 %v1263
        %v1266 = vunpack.c.h.b16 %v1263
        %v1267 = vpack.c.b16 %v1265, %v1265
        %v1268 = vpack.c.b16 %v1266, %v1266
        %1271 = vst [vmem:[%s268 + $0x8] sm:$0xf] %v1267
        %1272 = vst [vmem:[%s268 + $0xc] sm:$0xf] %v1268
        %s1273 = sadd.s32 %s1230, 2
        %s1274 = sld [smem:[#allocation3 + %s1273]]
        %s1275 = smul.u32 %s1274, 4
        %s1276 = scalar_lea.vmem [#allocation9], %s1275
        %v1277 = vld [vmem:[%s1276] sm:$0xf]
        %v1279 = vrot.slane %v1277, 4
        %v1281 = vsel %vm1238, %v1277, %v1279
        %v1282 = vadd.f32 %v1172, %v1281
        %v1283 = vadd.f32 %v1177, %v1281
        %v1284 = vpack.c.bf16 %v1283, %v1282
        %v1286 = vunpack.c.l.b16 %v1284
        %v1287 = vunpack.c.h.b16 %v1284
        %v1288 = vpack.c.b16 %v1286, %v1286
        %v1289 = vpack.c.b16 %v1287, %v1287
        %1292 = vst [vmem:[%s268 + $0x10] sm:$0xf] %v1288
        %1293 = vst [vmem:[%s268 + $0x14] sm:$0xf] %v1289
        %s1294 = sadd.s32 %s1230, 3
        %s1295 = sld [smem:[#allocation3 + %s1294]]
        %s1296 = smul.u32 %s1295, 4
        %s1297 = scalar_lea.vmem [#allocation9], %s1296
        %v1298 = vld [vmem:[%s1297] sm:$0xf]
        %v1300 = vrot.slane %v1298, 4
        %v1302 = vsel %vm1238, %v1298, %v1300
        %v1303 = vadd.f32 %v1182, %v1302
        %v1304 = vadd.f32 %v1187, %v1302
        %v1305 = vpack.c.bf16 %v1304, %v1303
        %v1307 = vunpack.c.l.b16 %v1305
        %v1308 = vunpack.c.h.b16 %v1305
        %v1309 = vpack.c.b16 %v1307, %v1307
        %v1310 = vpack.c.b16 %v1308, %v1308
        %1313 = vst [vmem:[%s268 + $0x18] sm:$0xf] %v1309
        %1314 = vst [vmem:[%s268 + $0x1c] sm:$0xf] %v1310
        %s1315 = sadd.s32 %s1230, 4
        %s1316 = sld [smem:[#allocation3 + %s1315]]
        %s1317 = smul.u32 %s1316, 4
        %s1318 = scalar_lea.vmem [#allocation9], %s1317
        %v1319 = vld [vmem:[%s1318] sm:$0xf]
        %v1321 = vrot.slane %v1319, 4
        %v1323 = vsel %vm1238, %v1319, %v1321
        %v1324 = vadd.f32 %v1192, %v1323
        %v1325 = vadd.f32 %v1197, %v1323
        %v1326 = vpack.c.bf16 %v1325, %v1324
        %v1328 = vunpack.c.l.b16 %v1326
        %v1329 = vunpack.c.h.b16 %v1326
        %v1330 = vpack.c.b16 %v1328, %v1328
        %v1331 = vpack.c.b16 %v1329, %v1329
        %1334 = vst [vmem:[%s268 + $0x20] sm:$0xf] %v1330
        %1335 = vst [vmem:[%s268 + $0x24] sm:$0xf] %v1331
        %s1336 = sadd.s32 %s1230, 5
        %s1337 = sld [smem:[#allocation3 + %s1336]]
        %s1338 = smul.u32 %s1337, 4
        %s1339 = scalar_lea.vmem [#allocation9], %s1338
        %v1340 = vld [vmem:[%s1339] sm:$0xf]
        %v1342 = vrot.slane %v1340, 4
        %v1344 = vsel %vm1238, %v1340, %v1342
        %v1345 = vadd.f32 %v1202, %v1344
        %v1346 = vadd.f32 %v1207, %v1344
        %v1347 = vpack.c.bf16 %v1346, %v1345
        %v1349 = vunpack.c.l.b16 %v1347
        %v1350 = vunpack.c.h.b16 %v1347
        %v1351 = vpack.c.b16 %v1349, %v1349
        %v1352 = vpack.c.b16 %v1350, %v1350
        %1355 = vst [vmem:[%s268 + $0x28] sm:$0xf] %v1351
        %1356 = vst [vmem:[%s268 + $0x2c] sm:$0xf] %v1352
        %s1357 = sadd.s32 %s1230, 6
        %s1358 = sld [smem:[#allocation3 + %s1357]]
        %s1359 = smul.u32 %s1358, 4
        %s1360 = scalar_lea.vmem [#allocation9], %s1359
        %v1361 = vld [vmem:[%s1360] sm:$0xf]
        %v1363 = vrot.slane %v1361, 4
        %v1365 = vsel %vm1238, %v1361, %v1363
        %v1366 = vadd.f32 %v1212, %v1365
        %v1367 = vadd.f32 %v1217, %v1365
        %v1368 = vpack.c.bf16 %v1367, %v1366
        %v1370 = vunpack.c.l.b16 %v1368
        %v1371 = vunpack.c.h.b16 %v1368
        %v1372 = vpack.c.b16 %v1370, %v1370
        %v1373 = vpack.c.b16 %v1371, %v1371
        %1376 = vst [vmem:[%s268 + $0x30] sm:$0xf] %v1372
        %1377 = vst [vmem:[%s268 + $0x34] sm:$0xf] %v1373
        %s1378 = sadd.s32 %s1230, 7
        %s1379 = sld [smem:[#allocation3 + %s1378]]
        %s1380 = smul.u32 %s1379, 4
        %s1381 = scalar_lea.vmem [#allocation9], %s1380
        %v1382 = vld [vmem:[%s1381] sm:$0xf]
        %v1384 = vrot.slane %v1382, 4
        %v1386 = vsel %vm1238, %v1382, %v1384
        %v1387 = vadd.f32 %v1222, %v1386
        %v1388 = vadd.f32 %v1227, %v1386
        %v1389 = vpack.c.bf16 %v1388, %v1387
        %v1391 = vunpack.c.l.b16 %v1389
        %v1392 = vunpack.c.h.b16 %v1389
        %v1393 = vpack.c.b16 %v1391, %v1391
        %v1394 = vpack.c.b16 %v1392, %v1392
        %1397 = vst [vmem:[%s268 + $0x38] sm:$0xf] %v1393
        %1398 = vst [vmem:[%s268 + $0x3c] sm:$0xf] %v1394
        %s1399 = sand.u32 %s131, 1
        %s1400 = scalar_lea.sflag [#allocation6], %s1399
        %s1401 = sand.u32 %s131, 1
        %s1402 = smul.addr %s1401, 64
        %s1403 = scalar_lea.vmem [#allocation10], %s1402
        // Predicated region
        $region49: #{tpu_custom_call.1} parent=35 // pred_check
          %p1404 = pneg %p141
        $region50: #{tpu_custom_call.1} parent=35 // pred_check_branch
          %1406 = sbr.rel (%p1404) target = $region52
        $region51: #{tpu_custom_call.1} parent=35 // pred_region
          %s1407 = smul.u32 16, %s29
          %s1409 = ssub.s32 1024, 1024
          %1410 = vsyncadd %s1400, %s1409
          %s1411 = smul.addr %s1407, 64
          %s1412 = scalar_lea.hbm %s5, %s1411
          %s1413 = sshll.u32 %s1403, 4
          %s1414 = int_to_ptr.vmem [resolvable:$true] %s1413
          %1419 = dma.vmem_to_hbm [thread:$0]  %s1414, 1024, %s1412, %s1400, 64, 64, 4
        $region52: #{tpu_custom_call.1} parent=35 // pred_fallthru
          _
      $region36: #{tpu_custom_call.1} parent=5 // pred_fallthru
        _
      %p1420 = scmp.le.s32.totalorder 2, %s24
      // Predicated region
      $region53: #{tpu_custom_call.1} parent=5 // pred_check
        %p1421 = pneg %p1420
      $region54: #{tpu_custom_call.1} parent=5 // pred_check_branch
        %1423 = sbr.rel (%p1421) target = $region56
      $region55: #{tpu_custom_call.1} parent=5 // pred_region
        %s1424 = ssub.s32 %s24, 2
        // Predicated region
        $region57: #{tpu_custom_call.1} parent=55 // pred_check
          %p1425 = pneg %p147
        $region58: #{tpu_custom_call.1} parent=55 // pred_check_branch
          %1427 = sbr.rel (%p1425) target = $region60
        $region59: #{tpu_custom_call.1} parent=55 // pred_region
          %s1428 = sand.u32 %s132, 1
          %s1429 = scalar_lea.sflag [#allocation6], %s1428
          %s1430 = sand.u32 %s132, 1
          %s1431 = smul.addr %s1430, 64
          %s1432 = scalar_lea.vmem [#allocation10], %s1431
          %1433 = dma.done %s1429, 1024
        $region60: #{tpu_custom_call.1} parent=55 // pred_fallthru
          _
      $region56: #{tpu_custom_call.1} parent=5 // pred_fallthru
        _
    $region6: #{tpu_custom_call.1} parent=1 // loop_footer
      %s28 = sadd.s32 1, %s24
    $region7: #{tpu_custom_call.1} parent=1 // loop_footer_branch
      %23 = sbr.rel target = $region3
    $region8: #{tpu_custom_call.1} parent=1 // loop_exit
      _
    %1434 = vsyncpa [#allocation5], 1
    %s1435 = scalar_lea.sflag [#allocation5], 1
    %1436 = vsyncpa %s1435, 1
    %1437 = vsyncpa [#allocation8], 1
    %s1438 = scalar_lea.sflag [#allocation8], 1
    %1439 = vsyncpa %s1438, 1
    %1440 = vsyncpa [#allocation6], 1
    %s1441 = scalar_lea.sflag [#allocation6], 1
    %1442 = vsyncpa %s1441, 1

</llo_original>
